<compile_context>
chip_gen: v7x
topology: tpu7x:2x2x1
jax: 0.10.0
libtpu: 0.0.40
codegen_flags: <defaults>
</compile_context>

<pallas_src>
import jax
import jax.numpy as jnp
import numpy as np
from jax.experimental import pallas as pl
from jax.experimental.pallas import tpu as pltpu


def _round_up(x, m):
  return (x + m - 1) // m * m


def _largest_divisor_leq(n, cap):
  for d in range(min(n, cap), 0, -1):
    if n % d == 0:
      return d
  return 1


# ---------------------------------------------------------------------------
# Kernel 1: feature MLP + input-side GRU gate slabs (all x-only work).
# ---------------------------------------------------------------------------
def feature_gates_kernel(x_ref, w1i_ref, b1i_ref, w2_ref, b2_ref,
                         wig_ref, big_ref, gx_ref):
  x = x_ref[...]                                                   # (TM, D) bf16
  # relu(fc1(x)) || relu(fc_i(x))  -- fused into one D -> 2H matmul
  x1 = jnp.maximum(
      jnp.dot(x, w1i_ref[...], preferred_element_type=jnp.float32)
      + b1i_ref[...], 0.0)                                         # (TM, 2H) f32
  # relu(fc2(cat([x1, x1_i])))
  x2 = jnp.maximum(
      jnp.dot(x1.astype(w2_ref.dtype), w2_ref[...],
              preferred_element_type=jnp.float32) + b2_ref[...], 0.0)   # (TM,H)
  x2c = x2.astype(wig_ref.dtype)
  # Per-gate input pre-activations on a leading gate axis (no lane slicing
  # later on the serial chain).  b_hr/b_hz already folded into big[0]/big[1].
  gx_ref[0] = jnp.dot(x2c, wig_ref[0],
                      preferred_element_type=jnp.float32) + big_ref[0]
  gx_ref[1] = jnp.dot(x2c, wig_ref[1],
                      preferred_element_type=jnp.float32) + big_ref[1]
  gx_ref[2] = jnp.dot(x2c, wig_ref[2],
                      preferred_element_type=jnp.float32) + big_ref[2]


# ---------------------------------------------------------------------------
# Kernel 2: GRU recurrence (TT steps per grid step) with the q head fused into
# every step's epilogue.  h is carried in a VMEM scratch across time chunks.
# ---------------------------------------------------------------------------
def gru_q_kernel(gx_ref, h0_ref, whg_ref, bhn_ref, w3_ref, b3_ref,
                 hs_ref, q_ref, h_scr):
  tc = pl.program_id(1)

  @pl.when(tc == 0)
  def _():
    h_scr[...] = h0_ref[...]

  TT = gx_ref.shape[1]
  wd = whg_ref.dtype
  h = h_scr[...]                                                   # (TB, H) f32

  # TT is small & static: a plain unrolled loop == lax.fori_loop(unroll=True)
  # but with fully static gx/hs/q indices (no per-step dynamic-slice math).
  for j in range(TT):
    hc = h.astype(wd)
    gh_r = jnp.dot(hc, whg_ref[0], preferred_element_type=jnp.float32)
    gh_z = jnp.dot(hc, whg_ref[1], preferred_element_type=jnp.float32)
    gh_n = (jnp.dot(hc, whg_ref[2], preferred_element_type=jnp.float32)
            + bhn_ref[...])
    # PyTorch GRUCell semantics: r applied inside the candidate (with b_hn).
    r = jax.nn.sigmoid(gx_ref[0, j] + gh_r)
    z = jax.nn.sigmoid(gx_ref[1, j] + gh_z)
    n = jnp.tanh(gx_ref[2, j] + r * gh_n)
    h = (1.0 - z) * n + z * h
    hs_ref[j] = h
    # fused q head: (TB,H)@(H,A) is free filler on the otherwise-idle MXU.
    q_ref[j] = (jnp.dot(h.astype(w3_ref.dtype), w3_ref[...],
                        preferred_element_type=jnp.float32) + b3_ref[...])

  h_scr[...] = h


# ---------------------------------------------------------------------------
# Wrapper
# ---------------------------------------------------------------------------
def rnn_icm_agent_forward(inputs, hidden_state, p,
                          compute_dtype=jnp.bfloat16):
  """inputs: (bs, ts, na, D); hidden_state: (bs, na, H). Returns (q, hs)."""
  bs, ts, na, D = inputs.shape
  H = p["w1"].shape[1]
  A = p["w3"].shape[1]
  B = bs * na
  cd = compute_dtype

  # ---- fuse / pack weights (stored (in, out): kernels compute x @ W + b) ----
  w1i = jnp.concatenate([p["w1"], p["wi"]], axis=1).astype(cd)      # (D, 2H)
  b1i = jnp.concatenate([p["b1"], p["bi"]], axis=1)                 # (1, 2H)
  w2 = jnp.concatenate([p["w2a"], p["w2b"]], axis=0).astype(cd)     # (2H, H)
  b2 = p["b2"]                                                      # (1, H)
  wig = jnp.stack([p["wir"], p["wiz"], p["win"]]).astype(cd)        # (3, H, H)
  # h-side r/z biases folded into the x-side slab (pre-activation is gx + gh,
  # both biases purely additive); b_hn stays with gh_n (r applied inside).
  big = jnp.stack([p["bir"] + p["bhr"],
                   p["biz"] + p["bhz"],
                   p["bin"]])                                       # (3, 1, H)
  whg = jnp.stack([p["whr"], p["whz"], p["whn"]]).astype(cd)        # (3, H, H)
  bhn = p["bhn"]                                                    # (1, H)
  w3 = p["w3"].astype(cd)                                           # (H, A)
  b3 = p["b3"]                                                      # (1, A)

  # ---- batch tiling: minimize padding, cap at 256 rows/tile, prefer >=2 -----
  # tiles when B allows so both v7x TensorCores get a share of the recurrence.
  n_btiles = max(1, -(-B // 256))
  if B > 8 and n_btiles < 2:
    n_btiles = 2
  TB = _round_up(-(-B // n_btiles), 8)
  Bp = _round_up(B, TB)
  n_btiles = Bp // TB

  # ---- time chunking: TT recurrence steps per grid step --------------------
  TT_TARGET = 16
  n_tchunks = max(1, -(-ts // TT_TARGET))
  TT = -(-ts // n_tchunks)
  ts_p = TT * n_tchunks          # zero-padded tail steps come AFTER all real
  M = ts_p * Bp                  # steps, so they never contaminate real h.

  # ---- feature-GEMM row tile: as large as possible (512-1024 rows ~ 85% of
  # HBM roofline) while still dividing M exactly (so no output unpadding copy).
  if Bp <= 1024:
    TM = Bp * _largest_divisor_leq(ts_p, max(1, 1024 // Bp))
  else:
    TM = TB

  # ---- time-major layout + padding -----------------------------------------
  # TODO(synk): for very large inputs this transpose/pad could be folded into
  # kernel 1's index_map instead of being materialized by XLA.
  x_tm = jnp.transpose(inputs, (1, 0, 2, 3)).reshape(ts, B, D)
  h0 = hidden_state.reshape(B, H).astype(jnp.float32)
  if Bp != B or ts_p != ts:
    x_tm = jnp.pad(x_tm, ((0, ts_p - ts), (0, Bp - B), (0, 0)))
  if Bp != B:
    h0 = jnp.pad(h0, ((0, Bp - B), (0, 0)))
  x_flat = x_tm.reshape(M, D).astype(cd)

  # ---- kernel 1: x-only feature + input-gate slabs --------------------------
  gx = pl.pallas_call(
      feature_gates_kernel,
      out_shape=jax.ShapeDtypeStruct((3, M, H), jnp.float32),
      grid=(M // TM,),
      in_specs=[
          pl.BlockSpec((TM, D), lambda i: (i, 0)),
          pl.BlockSpec((D, 2 * H), lambda i: (0, 0)),
          pl.BlockSpec((1, 2 * H), lambda i: (0, 0)),
          pl.BlockSpec((2 * H, H), lambda i: (0, 0)),
          pl.BlockSpec((1, H), lambda i: (0, 0)),
          pl.BlockSpec((3, H, H), lambda i: (0, 0, 0)),
          pl.BlockSpec((3, 1, H), lambda i: (0, 0, 0)),
      ],
      out_specs=pl.BlockSpec((3, TM, H), lambda i: (0, i, 0)),
      compiler_params=pltpu.CompilerParams(
          dimension_semantics=("parallel",)),
  )(x_flat, w1i, b1i, w2, b2, wig, big)

  gx = gx.reshape(3, ts_p, Bp, H)

  # ---- kernel 2: GRU recurrence + fused q head -------------------------------
  hs_tm, q_tm = pl.pallas_call(
      gru_q_kernel,
      out_shape=(jax.ShapeDtypeStruct((ts_p, Bp, H), jnp.float32),
                 jax.ShapeDtypeStruct((ts_p, Bp, A), jnp.float32)),
      grid=(n_btiles, n_tchunks),
      in_specs=[
          pl.BlockSpec((3, TT, TB, H), lambda b, t: (0, t, b, 0)),
          pl.BlockSpec((TB, H), lambda b, t: (b, 0)),
          pl.BlockSpec((3, H, H), lambda b, t: (0, 0, 0)),
          pl.BlockSpec((1, H), lambda b, t: (0, 0)),
          pl.BlockSpec((H, A), lambda b, t: (0, 0)),
          pl.BlockSpec((1, A), lambda b, t: (0, 0)),
      ],
      out_specs=(pl.BlockSpec((TT, TB, H), lambda b, t: (t, b, 0)),
                 pl.BlockSpec((TT, TB, A), lambda b, t: (t, b, 0))),
      scratch_shapes=[pltpu.VMEM((TB, H), jnp.float32)],
      compiler_params=pltpu.CompilerParams(
          dimension_semantics=("parallel", "arbitrary")),
  )(gx, h0, whg, bhn, w3, b3)

  # ---- unpad + back to (bs, ts, na, ·) ---------------------------------------
  hs = hs_tm[:ts, :B].reshape(ts, bs, na, H)
  q = q_tm[:ts, :B].reshape(ts, bs, na, A)
  return jnp.transpose(q, (1, 0, 2, 3)), jnp.transpose(hs, (1, 0, 2, 3))


# ---------------------------------------------------------------------------
# Params + pure-JAX reference
# ---------------------------------------------------------------------------
def init_params(key, D, H, A):
  """Deterministic synthetic params (PyTorch-style uniform fan-in init).

  Weights are stored pre-transposed, shape (in, out), so kernels do x @ W + b.
  fc2's (H, 2H) input is split into w2a / w2b halves.
  """
  keys = iter(jax.random.split(key, 32))

  def u(fan_in, shape):
    bound = 1.0 / np.sqrt(fan_in)
    return jax.random.uniform(next(keys), shape, jnp.float32, -bound, bound)

  p = {}
  p["w1"], p["b1"] = u(D, (D, H)), u(D, (1, H))            # fc1
  p["wi"], p["bi"] = u(D, (D, H)), u(D, (1, H))            # fc_i (reserve_ori_f)
  p["w2a"], p["w2b"] = u(2 * H, (H, H)), u(2 * H, (H, H))  # fc2 split halves
  p["b2"] = u(2 * H, (1, H))
  for name in ("wir", "wiz", "win", "whr", "whz", "whn"):  # GRUCell weights
    p[name] = u(H, (H, H))
  for name in ("bir", "biz", "bin", "bhr", "bhz", "bhn"):  # GRUCell biases
    p[name] = u(H, (1, H))
  p["w3"], p["b3"] = u(H, (H, A)), u(H, (1, A))            # fc3
  return p


def reference_forward(inputs, hidden_state, p, compute_dtype=jnp.bfloat16):
  """Pure-JAX reference matching the PyTorch forward (reserve_ori_f=1) using
  the same bf16-operand / f32-accumulate rounding as the Pallas kernels."""
  bs, ts, na, D = inputs.shape
  H = p["w1"].shape[1]
  cd = compute_dtype

  def bdot(a, b):
    return jnp.dot(a.astype(cd), b.astype(cd),
                   preferred_element_type=jnp.float32)

  x1 = jax.nn.relu(bdot(inputs, p["w1"]) + p["b1"][0])
  x1i = jax.nn.relu(bdot(inputs, p["wi"]) + p["bi"][0])
  x2 = jax.nn.relu(bdot(x1, p["w2a"]) + bdot(x1i, p["w2b"]) + p["b2"][0])
  h = hidden_state.reshape(-1, H)
  hs = []
  for t in range(ts):
    xt = x2[:, t].reshape(-1, H)
    r = jax.nn.sigmoid(bdot(xt, p["wir"]) + p["bir"][0]
                       + bdot(h, p["whr"]) + p["bhr"][0])
    z = jax.nn.sigmoid(bdot(xt, p["wiz"]) + p["biz"][0]
                       + bdot(h, p["whz"]) + p["bhz"][0])
    n = jnp.tanh(bdot(xt, p["win"]) + p["bin"][0]
                 + r * (bdot(h, p["whn"]) + p["bhn"][0]))
    h = (1.0 - z) * n + z * h
    hs.append(h.reshape(bs, na, H))
  hs = jnp.stack(hs, axis=1)
  q = bdot(hs, p["w3"]) + p["b3"][0]
  return q, hs


if __name__ == "__main__":
  bs, ts, na = 2, 5, 3          # batch, time steps, n_agents
  D, H, A = 16, 32, 6           # input_shape, rnn_hidden_dim, n_actions

  key = jax.random.PRNGKey(0)
  k_in, k_h, k_p = jax.random.split(key, 3)

  inputs = jax.random.normal(k_in, (bs, ts, na, D), jnp.float32)
  hidden = 0.1 * jax.random.normal(k_h, (bs, na, H), jnp.float32)
  params = init_params(k_p, D, H, A)

  fwd = jax.jit(rnn_icm_agent_forward)
  q, hs = jax.block_until_ready(fwd(inputs, hidden, params))

  q_ref, hs_ref = reference_forward(inputs, hidden, params)
  np.testing.assert_allclose(np.asarray(q), np.asarray(q_ref),
                             rtol=1e-3, atol=1e-3)
  np.testing.assert_allclose(np.asarray(hs), np.asarray(hs_ref),
                             rtol=1e-3, atol=1e-3)

  assert q.shape == (bs, ts, na, A) and hs.shape == (bs, ts, na, H)
  print("KERNEL_OK")
</pallas_src>

<mosaic_0001>
module attributes {stable_mosaic.version = 11 : i64} {
  func.func @feature_gates_kernel(%arg0: i32, %arg1: memref<40x16xbf16, #tpu.memory_space<vmem>>, %arg2: memref<16x64xbf16, #tpu.memory_space<vmem>>, %arg3: memref<1x64xf32, #tpu.memory_space<vmem>>, %arg4: memref<64x32xbf16, #tpu.memory_space<vmem>>, %arg5: memref<1x32xf32, #tpu.memory_space<vmem>>, %arg6: memref<3x32x32xbf16, #tpu.memory_space<vmem>>, %arg7: memref<3x1x32xf32, #tpu.memory_space<vmem>>, %arg8: memref<3x40x32xf32, #tpu.memory_space<vmem>>) attributes {dimension_semantics = [#tpu.dimension_semantics<parallel>], iteration_bounds = array<i64: 1>, scalar_prefetch = 0 : i64, scratch_operands = 0 : i64, tpu.core_type = #tpu.core_type<tc>, window_params = [{transform_indices = @transform_0, window_bounds = array<i64: 40, 16>}, {pipeline_mode = #tpu.pipeline_mode<synchronous>, transform_indices = @transform_1, window_bounds = array<i64: 16, 64>}, {pipeline_mode = #tpu.pipeline_mode<synchronous>, transform_indices = @transform_2, window_bounds = array<i64: 1, 64>}, {pipeline_mode = #tpu.pipeline_mode<synchronous>, transform_indices = @transform_3, window_bounds = array<i64: 64, 32>}, {pipeline_mode = #tpu.pipeline_mode<synchronous>, transform_indices = @transform_4, window_bounds = array<i64: 1, 32>}, {pipeline_mode = #tpu.pipeline_mode<synchronous>, transform_indices = @transform_5, window_bounds = array<i64: 3, 32, 32>}, {pipeline_mode = #tpu.pipeline_mode<synchronous>, transform_indices = @transform_6, window_bounds = array<i64: 3, 1, 32>}, {transform_indices = @transform_7, window_bounds = array<i64: 3, 40, 32>}]} {
    %c0 = arith.constant 0 : index
    %c0_0 = arith.constant 0 : index
    %0 = vector.load %arg1[%c0, %c0_0] : memref<40x16xbf16, #tpu.memory_space<vmem>>, vector<40x16xbf16>
    %c0_1 = arith.constant 0 : index
    %c0_2 = arith.constant 0 : index
    %1 = vector.load %arg2[%c0_1, %c0_2] : memref<16x64xbf16, #tpu.memory_space<vmem>>, vector<16x64xbf16>
    %cst = arith.constant dense<0.000000e+00> : vector<40x64xf32>
    %2 = tpu.matmul %0, %1, %cst {dimension_numbers = #tpu.dot_dimension_numbers<[1], [0], [0], [1], [0, 0, 1, 1], [], []>} : vector<40x16xbf16>, vector<16x64xbf16>, vector<40x64xf32> -> vector<40x64xf32>
    %c0_3 = arith.constant 0 : index
    %c0_4 = arith.constant 0 : index
    %3 = vector.load %arg3[%c0_3, %c0_4] : memref<1x64xf32, #tpu.memory_space<vmem>>, vector<1x64xf32>
    %4 = vector.broadcast %3 : vector<1x64xf32> to vector<40x64xf32>
    %5 = arith.addf %2, %4 : vector<40x64xf32>
    %cst_5 = arith.constant 0.000000e+00 : f32
    %6 = vector.broadcast %cst_5 : f32 to vector<40x64xf32>
    %7 = arith.maximumf %5, %6 : vector<40x64xf32>
    %8 = arith.truncf %7 : vector<40x64xf32> to vector<40x64xbf16>
    %c0_6 = arith.constant 0 : index
    %c0_7 = arith.constant 0 : index
    %9 = vector.load %arg4[%c0_6, %c0_7] : memref<64x32xbf16, #tpu.memory_space<vmem>>, vector<64x32xbf16>
    %cst_8 = arith.constant dense<0.000000e+00> : vector<40x32xf32>
    %10 = tpu.matmul %8, %9, %cst_8 {dimension_numbers = #tpu.dot_dimension_numbers<[1], [0], [0], [1], [0, 0, 1, 1], [], []>} : vector<40x64xbf16>, vector<64x32xbf16>, vector<40x32xf32> -> vector<40x32xf32>
    %c0_9 = arith.constant 0 : index
    %c0_10 = arith.constant 0 : index
    %11 = vector.load %arg5[%c0_9, %c0_10] : memref<1x32xf32, #tpu.memory_space<vmem>>, vector<1x32xf32>
    %12 = vector.broadcast %11 : vector<1x32xf32> to vector<40x32xf32>
    %13 = arith.addf %10, %12 : vector<40x32xf32>
    %cst_11 = arith.constant 0.000000e+00 : f32
    %14 = vector.broadcast %cst_11 : f32 to vector<40x32xf32>
    %15 = arith.maximumf %13, %14 : vector<40x32xf32>
    %16 = arith.truncf %15 : vector<40x32xf32> to vector<40x32xbf16>
    %c0_12 = arith.constant 0 : index
    %c0_13 = arith.constant 0 : index
    %c0_14 = arith.constant 0 : index
    %17 = vector.load %arg6[%c0_12, %c0_13, %c0_14] : memref<3x32x32xbf16, #tpu.memory_space<vmem>>, vector<1x32x32xbf16>
    %18 = vector.shape_cast %17 : vector<1x32x32xbf16> to vector<32x32xbf16>
    %cst_15 = arith.constant dense<0.000000e+00> : vector<40x32xf32>
    %19 = tpu.matmul %16, %18, %cst_15 {dimension_numbers = #tpu.dot_dimension_numbers<[1], [0], [0], [1], [0, 0, 1, 1], [], []>} : vector<40x32xbf16>, vector<32x32xbf16>, vector<40x32xf32> -> vector<40x32xf32>
    %c0_16 = arith.constant 0 : index
    %c0_17 = arith.constant 0 : index
    %c0_18 = arith.constant 0 : index
    %20 = vector.load %arg7[%c0_16, %c0_17, %c0_18] : memref<3x1x32xf32, #tpu.memory_space<vmem>>, vector<1x1x32xf32>
    %21 = vector.shape_cast %20 : vector<1x1x32xf32> to vector<1x32xf32>
    %22 = vector.broadcast %21 : vector<1x32xf32> to vector<40x32xf32>
    %23 = arith.addf %19, %22 : vector<40x32xf32>
    %c0_19 = arith.constant 0 : index
    %c0_20 = arith.constant 0 : index
    %c0_21 = arith.constant 0 : index
    %24 = vector.load %arg8[%c0_19, %c0_20, %c0_21] : memref<3x40x32xf32, #tpu.memory_space<vmem>>, vector<1x40x32xf32>
    %25 = vector.shape_cast %24 : vector<1x40x32xf32> to vector<40x32xf32>
    %26 = vector.shape_cast %23 : vector<40x32xf32> to vector<1x40x32xf32>
    tpu.vector_store %arg8[%c0_19, %c0_20, %c0_21], %26 {strides = array<i32>} : memref<3x40x32xf32, #tpu.memory_space<vmem>>, vector<1x40x32xf32>,
    %c1 = arith.constant 1 : index
    %c0_22 = arith.constant 0 : index
    %c0_23 = arith.constant 0 : index
    %27 = vector.load %arg6[%c1, %c0_22, %c0_23] : memref<3x32x32xbf16, #tpu.memory_space<vmem>>, vector<1x32x32xbf16>
    %28 = vector.shape_cast %27 : vector<1x32x32xbf16> to vector<32x32xbf16>
    %cst_24 = arith.constant dense<0.000000e+00> : vector<40x32xf32>
    %29 = tpu.matmul %16, %28, %cst_24 {dimension_numbers = #tpu.dot_dimension_numbers<[1], [0], [0], [1], [0, 0, 1, 1], [], []>} : vector<40x32xbf16>, vector<32x32xbf16>, vector<40x32xf32> -> vector<40x32xf32>
    %c1_25 = arith.constant 1 : index
    %c0_26 = arith.constant 0 : index
    %c0_27 = arith.constant 0 : index
    %30 = vector.load %arg7[%c1_25, %c0_26, %c0_27] : memref<3x1x32xf32, #tpu.memory_space<vmem>>, vector<1x1x32xf32>
    %31 = vector.shape_cast %30 : vector<1x1x32xf32> to vector<1x32xf32>
    %32 = vector.broadcast %31 : vector<1x32xf32> to vector<40x32xf32>
    %33 = arith.addf %29, %32 : vector<40x32xf32>
    %c1_28 = arith.constant 1 : index
    %c0_29 = arith.constant 0 : index
    %c0_30 = arith.constant 0 : index
    %34 = vector.load %arg8[%c1_28, %c0_29, %c0_30] : memref<3x40x32xf32, #tpu.memory_space<vmem>>, vector<1x40x32xf32>
    %35 = vector.shape_cast %34 : vector<1x40x32xf32> to vector<40x32xf32>
    %36 = vector.shape_cast %33 : vector<40x32xf32> to vector<1x40x32xf32>
    tpu.vector_store %arg8[%c1_28, %c0_29, %c0_30], %36 {strides = array<i32>} : memref<3x40x32xf32, #tpu.memory_space<vmem>>, vector<1x40x32xf32>,
    %c2 = arith.constant 2 : index
    %c0_31 = arith.constant 0 : index
    %c0_32 = arith.constant 0 : index
    %37 = vector.load %arg6[%c2, %c0_31, %c0_32] : memref<3x32x32xbf16, #tpu.memory_space<vmem>>, vector<1x32x32xbf16>
    %38 = vector.shape_cast %37 : vector<1x32x32xbf16> to vector<32x32xbf16>
    %cst_33 = arith.constant dense<0.000000e+00> : vector<40x32xf32>
    %39 = tpu.matmul %16, %38, %cst_33 {dimension_numbers = #tpu.dot_dimension_numbers<[1], [0], [0], [1], [0, 0, 1, 1], [], []>} : vector<40x32xbf16>, vector<32x32xbf16>, vector<40x32xf32> -> vector<40x32xf32>
    %c2_34 = arith.constant 2 : index
    %c0_35 = arith.constant 0 : index
    %c0_36 = arith.constant 0 : index
    %40 = vector.load %arg7[%c2_34, %c0_35, %c0_36] : memref<3x1x32xf32, #tpu.memory_space<vmem>>, vector<1x1x32xf32>
    %41 = vector.shape_cast %40 : vector<1x1x32xf32> to vector<1x32xf32>
    %42 = vector.broadcast %41 : vector<1x32xf32> to vector<40x32xf32>
    %43 = arith.addf %39, %42 : vector<40x32xf32>
    %c2_37 = arith.constant 2 : index
    %c0_38 = arith.constant 0 : index
    %c0_39 = arith.constant 0 : index
    %44 = vector.load %arg8[%c2_37, %c0_38, %c0_39] : memref<3x40x32xf32, #tpu.memory_space<vmem>>, vector<1x40x32xf32>
    %45 = vector.shape_cast %44 : vector<1x40x32xf32> to vector<40x32xf32>
    %46 = vector.shape_cast %43 : vector<40x32xf32> to vector<1x40x32xf32>
    tpu.vector_store %arg8[%c2_37, %c0_38, %c0_39], %46 {strides = array<i32>} : memref<3x40x32xf32, #tpu.memory_space<vmem>>, vector<1x40x32xf32>,
    return
  }
  func.func @transform_0(%arg0: i32) -> (i32, i32) {
    %c0_i32 = arith.constant 0 : i32
    %c0_i32_0 = arith.constant 0 : i32
    return %arg0, %c0_i32 : i32, i32
  }
  func.func @transform_1(%arg0: i32) -> (i32, i32) {
    %c0_i32 = arith.constant 0 : i32
    %c0_i32_0 = arith.constant 0 : i32
    %c0_i32_1 = arith.constant 0 : i32
    return %c0_i32, %c0_i32_0 : i32, i32
  }
  func.func @transform_2(%arg0: i32) -> (i32, i32) {
    %c0_i32 = arith.constant 0 : i32
    %c0_i32_0 = arith.constant 0 : i32
    %c0_i32_1 = arith.constant 0 : i32
    return %c0_i32, %c0_i32_0 : i32, i32
  }
  func.func @transform_3(%arg0: i32) -> (i32, i32) {
    %c0_i32 = arith.constant 0 : i32
    %c0_i32_0 = arith.constant 0 : i32
    %c0_i32_1 = arith.constant 0 : i32
    return %c0_i32, %c0_i32_0 : i32, i32
  }
  func.func @transform_4(%arg0: i32) -> (i32, i32) {
    %c0_i32 = arith.constant 0 : i32
    %c0_i32_0 = arith.constant 0 : i32
    %c0_i32_1 = arith.constant 0 : i32
    return %c0_i32, %c0_i32_0 : i32, i32
  }
  func.func @transform_5(%arg0: i32) -> (i32, i32, i32) {
    %c0_i32 = arith.constant 0 : i32
    %c0_i32_0 = arith.constant 0 : i32
    %c0_i32_1 = arith.constant 0 : i32
    %c0_i32_2 = arith.constant 0 : i32
    return %c0_i32, %c0_i32_0, %c0_i32_1 : i32, i32, i32
  }
  func.func @transform_6(%arg0: i32) -> (i32, i32, i32) {
    %c0_i32 = arith.constant 0 : i32
    %c0_i32_0 = arith.constant 0 : i32
    %c0_i32_1 = arith.constant 0 : i32
    %c0_i32_2 = arith.constant 0 : i32
    return %c0_i32, %c0_i32_0, %c0_i32_1 : i32, i32, i32
  }
  func.func @transform_7(%arg0: i32) -> (i32, i32, i32) {
    %c0_i32 = arith.constant 0 : i32
    %c0_i32_0 = arith.constant 0 : i32
    %c0_i32_1 = arith.constant 0 : i32
    return %c0_i32, %arg0, %c0_i32_0 : i32, i32, i32
  }
}

module attributes {stable_mosaic.version = 11 : i64} {
  func.func @gru_q_kernel(%arg0: i32, %arg1: i32, %arg2: memref<3x5x8x32xf32, #tpu.memory_space<vmem>>, %arg3: memref<8x32xf32, #tpu.memory_space<vmem>>, %arg4: memref<3x32x32xbf16, #tpu.memory_space<vmem>>, %arg5: memref<1x32xf32, #tpu.memory_space<vmem>>, %arg6: memref<32x6xbf16, #tpu.memory_space<vmem>>, %arg7: memref<1x6xf32, #tpu.memory_space<vmem>>, %arg8: memref<5x8x32xf32, #tpu.memory_space<vmem>>, %arg9: memref<5x8x6xf32, #tpu.memory_space<vmem>>, %arg10: memref<8x32xf32, #tpu.memory_space<vmem>>) attributes {dimension_semantics = [#tpu.dimension_semantics<parallel>, #tpu.dimension_semantics<arbitrary>], iteration_bounds = array<i64: 1, 1>, scalar_prefetch = 0 : i64, scratch_operands = 1 : i64, tpu.core_type = #tpu.core_type<tc>, window_params = [{transform_indices = @transform_0, window_bounds = array<i64: 3, 5, 8, 32>}, {transform_indices = @transform_1, window_bounds = array<i64: 8, 32>}, {pipeline_mode = #tpu.pipeline_mode<synchronous>, transform_indices = @transform_2, window_bounds = array<i64: 3, 32, 32>}, {pipeline_mode = #tpu.pipeline_mode<synchronous>, transform_indices = @transform_3, window_bounds = array<i64: 1, 32>}, {pipeline_mode = #tpu.pipeline_mode<synchronous>, transform_indices = @transform_4, window_bounds = array<i64: 32, 6>}, {pipeline_mode = #tpu.pipeline_mode<synchronous>, transform_indices = @transform_5, window_bounds = array<i64: 1, 6>}, {transform_indices = @transform_6, window_bounds = array<i64: 5, 8, 32>}, {transform_indices = @transform_7, window_bounds = array<i64: 5, 8, 6>}]} {
    %c0_i32 = arith.constant 0 : i32
    %0 = arith.cmpi eq, %arg1, %c0_i32 : i32
    %1 = arith.extui %0 : i1 to i32
    %c0_i32_0 = arith.constant 0 : i32
    %2 = arith.cmpi ne, %1, %c0_i32_0 : i32
    scf.if %2 {
      %c0_199 = arith.constant 0 : index
      %c0_200 = arith.constant 0 : index
      %260 = vector.load %arg3[%c0_199, %c0_200] : memref<8x32xf32, #tpu.memory_space<vmem>>, vector<8x32xf32>
      %c0_201 = arith.constant 0 : index
      %c0_202 = arith.constant 0 : index
      %261 = vector.load %arg10[%c0_201, %c0_202] : memref<8x32xf32, #tpu.memory_space<vmem>>, vector<8x32xf32>
      tpu.vector_store %arg10[%c0_201, %c0_202], %260 {strides = array<i32>} : memref<8x32xf32, #tpu.memory_space<vmem>>, vector<8x32xf32>,
    } else {
    }
    %c0 = arith.constant 0 : index
    %c0_1 = arith.constant 0 : index
    %3 = vector.load %arg10[%c0, %c0_1] : memref<8x32xf32, #tpu.memory_space<vmem>>, vector<8x32xf32>
    %4 = arith.truncf %3 : vector<8x32xf32> to vector<8x32xbf16>
    %c0_2 = arith.constant 0 : index
    %c0_3 = arith.constant 0 : index
    %c0_4 = arith.constant 0 : index
    %5 = vector.load %arg4[%c0_2, %c0_3, %c0_4] : memref<3x32x32xbf16, #tpu.memory_space<vmem>>, vector<1x32x32xbf16>
    %6 = vector.shape_cast %5 : vector<1x32x32xbf16> to vector<32x32xbf16>
    %cst = arith.constant dense<0.000000e+00> : vector<8x32xf32>
    %7 = tpu.matmul %4, %6, %cst {dimension_numbers = #tpu.dot_dimension_numbers<[1], [0], [0], [1], [0, 0, 1, 1], [], []>} : vector<8x32xbf16>, vector<32x32xbf16>, vector<8x32xf32> -> vector<8x32xf32>
    %c1 = arith.constant 1 : index
    %c0_5 = arith.constant 0 : index
    %c0_6 = arith.constant 0 : index
    %8 = vector.load %arg4[%c1, %c0_5, %c0_6] : memref<3x32x32xbf16, #tpu.memory_space<vmem>>, vector<1x32x32xbf16>
    %9 = vector.shape_cast %8 : vector<1x32x32xbf16> to vector<32x32xbf16>
    %cst_7 = arith.constant dense<0.000000e+00> : vector<8x32xf32>
    %10 = tpu.matmul %4, %9, %cst_7 {dimension_numbers = #tpu.dot_dimension_numbers<[1], [0], [0], [1], [0, 0, 1, 1], [], []>} : vector<8x32xbf16>, vector<32x32xbf16>, vector<8x32xf32> -> vector<8x32xf32>
    %c2 = arith.constant 2 : index
    %c0_8 = arith.constant 0 : index
    %c0_9 = arith.constant 0 : index
    %11 = vector.load %arg4[%c2, %c0_8, %c0_9] : memref<3x32x32xbf16, #tpu.memory_space<vmem>>, vector<1x32x32xbf16>
    %12 = vector.shape_cast %11 : vector<1x32x32xbf16> to vector<32x32xbf16>
    %cst_10 = arith.constant dense<0.000000e+00> : vector<8x32xf32>
    %13 = tpu.matmul %4, %12, %cst_10 {dimension_numbers = #tpu.dot_dimension_numbers<[1], [0], [0], [1], [0, 0, 1, 1], [], []>} : vector<8x32xbf16>, vector<32x32xbf16>, vector<8x32xf32> -> vector<8x32xf32>
    %c0_11 = arith.constant 0 : index
    %c0_12 = arith.constant 0 : index
    %14 = vector.load %arg5[%c0_11, %c0_12] : memref<1x32xf32, #tpu.memory_space<vmem>>, vector<1x32xf32>
    %15 = vector.broadcast %14 : vector<1x32xf32> to vector<8x32xf32>
    %16 = arith.addf %13, %15 : vector<8x32xf32>
    %c0_13 = arith.constant 0 : index
    %c0_14 = arith.constant 0 : index
    %c0_15 = arith.constant 0 : index
    %c0_16 = arith.constant 0 : index
    %17 = vector.load %arg2[%c0_13, %c0_14, %c0_15, %c0_16] : memref<3x5x8x32xf32, #tpu.memory_space<vmem>>, vector<1x1x8x32xf32>
    %18 = vector.shape_cast %17 : vector<1x1x8x32xf32> to vector<8x32xf32>
    %19 = arith.addf %18, %7 : vector<8x32xf32>
    %20 = arith.negf %19 : vector<8x32xf32>
    %21 = math.exp %20 : vector<8x32xf32>
    %cst_17 = arith.constant 1.000000e+00 : f32
    %22 = vector.broadcast %cst_17 : f32 to vector<8x32xf32>
    %23 = arith.addf %22, %21 : vector<8x32xf32>
    %24 = arith.divf %22, %23 : vector<8x32xf32>
    %c1_18 = arith.constant 1 : index
    %c0_19 = arith.constant 0 : index
    %c0_20 = arith.constant 0 : index
    %c0_21 = arith.constant 0 : index
    %25 = vector.load %arg2[%c1_18, %c0_19, %c0_20, %c0_21] : memref<3x5x8x32xf32, #tpu.memory_space<vmem>>, vector<1x1x8x32xf32>
    %26 = vector.shape_cast %25 : vector<1x1x8x32xf32> to vector<8x32xf32>
    %27 = arith.addf %26, %10 : vector<8x32xf32>
    %28 = arith.negf %27 : vector<8x32xf32>
    %29 = math.exp %28 : vector<8x32xf32>
    %cst_22 = arith.constant 1.000000e+00 : f32
    %30 = vector.broadcast %cst_22 : f32 to vector<8x32xf32>
    %31 = arith.addf %30, %29 : vector<8x32xf32>
    %32 = arith.divf %30, %31 : vector<8x32xf32>
    %c2_23 = arith.constant 2 : index
    %c0_24 = arith.constant 0 : index
    %c0_25 = arith.constant 0 : index
    %c0_26 = arith.constant 0 : index
    %33 = vector.load %arg2[%c2_23, %c0_24, %c0_25, %c0_26] : memref<3x5x8x32xf32, #tpu.memory_space<vmem>>, vector<1x1x8x32xf32>
    %34 = vector.shape_cast %33 : vector<1x1x8x32xf32> to vector<8x32xf32>
    %35 = arith.mulf %24, %16 : vector<8x32xf32>
    %36 = arith.addf %34, %35 : vector<8x32xf32>
    %37 = math.tanh %36 : vector<8x32xf32>
    %cst_27 = arith.constant 1.000000e+00 : f32
    %38 = vector.broadcast %cst_27 : f32 to vector<8x32xf32>
    %39 = arith.subf %38, %32 : vector<8x32xf32>
    %40 = arith.mulf %39, %37 : vector<8x32xf32>
    %41 = arith.mulf %32, %3 : vector<8x32xf32>
    %42 = arith.addf %40, %41 : vector<8x32xf32>
    %c0_28 = arith.constant 0 : index
    %c0_29 = arith.constant 0 : index
    %c0_30 = arith.constant 0 : index
    %43 = vector.load %arg8[%c0_28, %c0_29, %c0_30] : memref<5x8x32xf32, #tpu.memory_space<vmem>>, vector<1x8x32xf32>
    %44 = vector.shape_cast %43 : vector<1x8x32xf32> to vector<8x32xf32>
    %45 = vector.shape_cast %42 : vector<8x32xf32> to vector<1x8x32xf32>
    tpu.vector_store %arg8[%c0_28, %c0_29, %c0_30], %45 {strides = array<i32>} : memref<5x8x32xf32, #tpu.memory_space<vmem>>, vector<1x8x32xf32>,
    %46 = arith.truncf %42 : vector<8x32xf32> to vector<8x32xbf16>
    %c0_31 = arith.constant 0 : index
    %c0_32 = arith.constant 0 : index
    %47 = vector.load %arg6[%c0_31, %c0_32] : memref<32x6xbf16, #tpu.memory_space<vmem>>, vector<32x6xbf16>
    %cst_33 = arith.constant dense<0.000000e+00> : vector<8x6xf32>
    %48 = tpu.matmul %46, %47, %cst_33 {dimension_numbers = #tpu.dot_dimension_numbers<[1], [0], [0], [1], [0, 0, 1, 1], [], []>} : vector<8x32xbf16>, vector<32x6xbf16>, vector<8x6xf32> -> vector<8x6xf32>
    %c0_34 = arith.constant 0 : index
    %c0_35 = arith.constant 0 : index
    %49 = vector.load %arg7[%c0_34, %c0_35] : memref<1x6xf32, #tpu.memory_space<vmem>>, vector<1x6xf32>
    %50 = vector.broadcast %49 : vector<1x6xf32> to vector<8x6xf32>
    %51 = arith.addf %48, %50 : vector<8x6xf32>
    %c0_36 = arith.constant 0 : index
    %c0_37 = arith.constant 0 : index
    %c0_38 = arith.constant 0 : index
    %52 = vector.load %arg9[%c0_36, %c0_37, %c0_38] : memref<5x8x6xf32, #tpu.memory_space<vmem>>, vector<1x8x6xf32>
    %53 = vector.shape_cast %52 : vector<1x8x6xf32> to vector<8x6xf32>
    %54 = vector.shape_cast %51 : vector<8x6xf32> to vector<1x8x6xf32>
    tpu.vector_store %arg9[%c0_36, %c0_37, %c0_38], %54 {strides = array<i32>} : memref<5x8x6xf32, #tpu.memory_space<vmem>>, vector<1x8x6xf32>,
    %55 = arith.truncf %42 : vector<8x32xf32> to vector<8x32xbf16>
    %c0_39 = arith.constant 0 : index
    %c0_40 = arith.constant 0 : index
    %c0_41 = arith.constant 0 : index
    %56 = vector.load %arg4[%c0_39, %c0_40, %c0_41] : memref<3x32x32xbf16, #tpu.memory_space<vmem>>, vector<1x32x32xbf16>
    %57 = vector.shape_cast %56 : vector<1x32x32xbf16> to vector<32x32xbf16>
    %cst_42 = arith.constant dense<0.000000e+00> : vector<8x32xf32>
    %58 = tpu.matmul %55, %57, %cst_42 {dimension_numbers = #tpu.dot_dimension_numbers<[1], [0], [0], [1], [0, 0, 1, 1], [], []>} : vector<8x32xbf16>, vector<32x32xbf16>, vector<8x32xf32> -> vector<8x32xf32>
    %c1_43 = arith.constant 1 : index
    %c0_44 = arith.constant 0 : index
    %c0_45 = arith.constant 0 : index
    %59 = vector.load %arg4[%c1_43, %c0_44, %c0_45] : memref<3x32x32xbf16, #tpu.memory_space<vmem>>, vector<1x32x32xbf16>
    %60 = vector.shape_cast %59 : vector<1x32x32xbf16> to vector<32x32xbf16>
    %cst_46 = arith.constant dense<0.000000e+00> : vector<8x32xf32>
    %61 = tpu.matmul %55, %60, %cst_46 {dimension_numbers = #tpu.dot_dimension_numbers<[1], [0], [0], [1], [0, 0, 1, 1], [], []>} : vector<8x32xbf16>, vector<32x32xbf16>, vector<8x32xf32> -> vector<8x32xf32>
    %c2_47 = arith.constant 2 : index
    %c0_48 = arith.constant 0 : index
    %c0_49 = arith.constant 0 : index
    %62 = vector.load %arg4[%c2_47, %c0_48, %c0_49] : memref<3x32x32xbf16, #tpu.memory_space<vmem>>, vector<1x32x32xbf16>
    %63 = vector.shape_cast %62 : vector<1x32x32xbf16> to vector<32x32xbf16>
    %cst_50 = arith.constant dense<0.000000e+00> : vector<8x32xf32>
    %64 = tpu.matmul %55, %63, %cst_50 {dimension_numbers = #tpu.dot_dimension_numbers<[1], [0], [0], [1], [0, 0, 1, 1], [], []>} : vector<8x32xbf16>, vector<32x32xbf16>, vector<8x32xf32> -> vector<8x32xf32>
    %c0_51 = arith.constant 0 : index
    %c0_52 = arith.constant 0 : index
    %65 = vector.load %arg5[%c0_51, %c0_52] : memref<1x32xf32, #tpu.memory_space<vmem>>, vector<1x32xf32>
    %66 = vector.broadcast %65 : vector<1x32xf32> to vector<8x32xf32>
    %67 = arith.addf %64, %66 : vector<8x32xf32>
    %c0_53 = arith.constant 0 : index
    %c1_54 = arith.constant 1 : index
    %c0_55 = arith.constant 0 : index
    %c0_56 = arith.constant 0 : index
    %68 = vector.load %arg2[%c0_53, %c1_54, %c0_55, %c0_56] : memref<3x5x8x32xf32, #tpu.memory_space<vmem>>, vector<1x1x8x32xf32>
    %69 = vector.shape_cast %68 : vector<1x1x8x32xf32> to vector<8x32xf32>
    %70 = arith.addf %69, %58 : vector<8x32xf32>
    %71 = arith.negf %70 : vector<8x32xf32>
    %72 = math.exp %71 : vector<8x32xf32>
    %cst_57 = arith.constant 1.000000e+00 : f32
    %73 = vector.broadcast %cst_57 : f32 to vector<8x32xf32>
    %74 = arith.addf %73, %72 : vector<8x32xf32>
    %75 = arith.divf %73, %74 : vector<8x32xf32>
    %c1_58 = arith.constant 1 : index
    %c1_59 = arith.constant 1 : index
    %c0_60 = arith.constant 0 : index
    %c0_61 = arith.constant 0 : index
    %76 = vector.load %arg2[%c1_58, %c1_59, %c0_60, %c0_61] : memref<3x5x8x32xf32, #tpu.memory_space<vmem>>, vector<1x1x8x32xf32>
    %77 = vector.shape_cast %76 : vector<1x1x8x32xf32> to vector<8x32xf32>
    %78 = arith.addf %77, %61 : vector<8x32xf32>
    %79 = arith.negf %78 : vector<8x32xf32>
    %80 = math.exp %79 : vector<8x32xf32>
    %cst_62 = arith.constant 1.000000e+00 : f32
    %81 = vector.broadcast %cst_62 : f32 to vector<8x32xf32>
    %82 = arith.addf %81, %80 : vector<8x32xf32>
    %83 = arith.divf %81, %82 : vector<8x32xf32>
    %c2_63 = arith.constant 2 : index
    %c1_64 = arith.constant 1 : index
    %c0_65 = arith.constant 0 : index
    %c0_66 = arith.constant 0 : index
    %84 = vector.load %arg2[%c2_63, %c1_64, %c0_65, %c0_66] : memref<3x5x8x32xf32, #tpu.memory_space<vmem>>, vector<1x1x8x32xf32>
    %85 = vector.shape_cast %84 : vector<1x1x8x32xf32> to vector<8x32xf32>
    %86 = arith.mulf %75, %67 : vector<8x32xf32>
    %87 = arith.addf %85, %86 : vector<8x32xf32>
    %88 = math.tanh %87 : vector<8x32xf32>
    %cst_67 = arith.constant 1.000000e+00 : f32
    %89 = vector.broadcast %cst_67 : f32 to vector<8x32xf32>
    %90 = arith.subf %89, %83 : vector<8x32xf32>
    %91 = arith.mulf %90, %88 : vector<8x32xf32>
    %92 = arith.mulf %83, %42 : vector<8x32xf32>
    %93 = arith.addf %91, %92 : vector<8x32xf32>
    %c1_68 = arith.constant 1 : index
    %c0_69 = arith.constant 0 : index
    %c0_70 = arith.constant 0 : index
    %94 = vector.load %arg8[%c1_68, %c0_69, %c0_70] : memref<5x8x32xf32, #tpu.memory_space<vmem>>, vector<1x8x32xf32>
    %95 = vector.shape_cast %94 : vector<1x8x32xf32> to vector<8x32xf32>
    %96 = vector.shape_cast %93 : vector<8x32xf32> to vector<1x8x32xf32>
    tpu.vector_store %arg8[%c1_68, %c0_69, %c0_70], %96 {strides = array<i32>} : memref<5x8x32xf32, #tpu.memory_space<vmem>>, vector<1x8x32xf32>,
    %97 = arith.truncf %93 : vector<8x32xf32> to vector<8x32xbf16>
    %c0_71 = arith.constant 0 : index
    %c0_72 = arith.constant 0 : index
    %98 = vector.load %arg6[%c0_71, %c0_72] : memref<32x6xbf16, #tpu.memory_space<vmem>>, vector<32x6xbf16>
    %cst_73 = arith.constant dense<0.000000e+00> : vector<8x6xf32>
    %99 = tpu.matmul %97, %98, %cst_73 {dimension_numbers = #tpu.dot_dimension_numbers<[1], [0], [0], [1], [0, 0, 1, 1], [], []>} : vector<8x32xbf16>, vector<32x6xbf16>, vector<8x6xf32> -> vector<8x6xf32>
    %c0_74 = arith.constant 0 : index
    %c0_75 = arith.constant 0 : index
    %100 = vector.load %arg7[%c0_74, %c0_75] : memref<1x6xf32, #tpu.memory_space<vmem>>, vector<1x6xf32>
    %101 = vector.broadcast %100 : vector<1x6xf32> to vector<8x6xf32>
    %102 = arith.addf %99, %101 : vector<8x6xf32>
    %c1_76 = arith.constant 1 : index
    %c0_77 = arith.constant 0 : index
    %c0_78 = arith.constant 0 : index
    %103 = vector.load %arg9[%c1_76, %c0_77, %c0_78] : memref<5x8x6xf32, #tpu.memory_space<vmem>>, vector<1x8x6xf32>
    %104 = vector.shape_cast %103 : vector<1x8x6xf32> to vector<8x6xf32>
    %105 = vector.shape_cast %102 : vector<8x6xf32> to vector<1x8x6xf32>
    tpu.vector_store %arg9[%c1_76, %c0_77, %c0_78], %105 {strides = array<i32>} : memref<5x8x6xf32, #tpu.memory_space<vmem>>, vector<1x8x6xf32>,
    %106 = arith.truncf %93 : vector<8x32xf32> to vector<8x32xbf16>
    %c0_79 = arith.constant 0 : index
    %c0_80 = arith.constant 0 : index
    %c0_81 = arith.constant 0 : index
    %107 = vector.load %arg4[%c0_79, %c0_80, %c0_81] : memref<3x32x32xbf16, #tpu.memory_space<vmem>>, vector<1x32x32xbf16>
    %108 = vector.shape_cast %107 : vector<1x32x32xbf16> to vector<32x32xbf16>
    %cst_82 = arith.constant dense<0.000000e+00> : vector<8x32xf32>
    %109 = tpu.matmul %106, %108, %cst_82 {dimension_numbers = #tpu.dot_dimension_numbers<[1], [0], [0], [1], [0, 0, 1, 1], [], []>} : vector<8x32xbf16>, vector<32x32xbf16>, vector<8x32xf32> -> vector<8x32xf32>
    %c1_83 = arith.constant 1 : index
    %c0_84 = arith.constant 0 : index
    %c0_85 = arith.constant 0 : index
    %110 = vector.load %arg4[%c1_83, %c0_84, %c0_85] : memref<3x32x32xbf16, #tpu.memory_space<vmem>>, vector<1x32x32xbf16>
    %111 = vector.shape_cast %110 : vector<1x32x32xbf16> to vector<32x32xbf16>
    %cst_86 = arith.constant dense<0.000000e+00> : vector<8x32xf32>
    %112 = tpu.matmul %106, %111, %cst_86 {dimension_numbers = #tpu.dot_dimension_numbers<[1], [0], [0], [1], [0, 0, 1, 1], [], []>} : vector<8x32xbf16>, vector<32x32xbf16>, vector<8x32xf32> -> vector<8x32xf32>
    %c2_87 = arith.constant 2 : index
    %c0_88 = arith.constant 0 : index
    %c0_89 = arith.constant 0 : index
    %113 = vector.load %arg4[%c2_87, %c0_88, %c0_89] : memref<3x32x32xbf16, #tpu.memory_space<vmem>>, vector<1x32x32xbf16>
    %114 = vector.shape_cast %113 : vector<1x32x32xbf16> to vector<32x32xbf16>
    %cst_90 = arith.constant dense<0.000000e+00> : vector<8x32xf32>
    %115 = tpu.matmul %106, %114, %cst_90 {dimension_numbers = #tpu.dot_dimension_numbers<[1], [0], [0], [1], [0, 0, 1, 1], [], []>} : vector<8x32xbf16>, vector<32x32xbf16>, vector<8x32xf32> -> vector<8x32xf32>
    %c0_91 = arith.constant 0 : index
    %c0_92 = arith.constant 0 : index
    %116 = vector.load %arg5[%c0_91, %c0_92] : memref<1x32xf32, #tpu.memory_space<vmem>>, vector<1x32xf32>
    %117 = vector.broadcast %116 : vector<1x32xf32> to vector<8x32xf32>
    %118 = arith.addf %115, %117 : vector<8x32xf32>
    %c0_93 = arith.constant 0 : index
    %c2_94 = arith.constant 2 : index
    %c0_95 = arith.constant 0 : index
    %c0_96 = arith.constant 0 : index
    %119 = vector.load %arg2[%c0_93, %c2_94, %c0_95, %c0_96] : memref<3x5x8x32xf32, #tpu.memory_space<vmem>>, vector<1x1x8x32xf32>
    %120 = vector.shape_cast %119 : vector<1x1x8x32xf32> to vector<8x32xf32>
    %121 = arith.addf %120, %109 : vector<8x32xf32>
    %122 = arith.negf %121 : vector<8x32xf32>
    %123 = math.exp %122 : vector<8x32xf32>
    %cst_97 = arith.constant 1.000000e+00 : f32
    %124 = vector.broadcast %cst_97 : f32 to vector<8x32xf32>
    %125 = arith.addf %124, %123 : vector<8x32xf32>
    %126 = arith.divf %124, %125 : vector<8x32xf32>
    %c1_98 = arith.constant 1 : index
    %c2_99 = arith.constant 2 : index
    %c0_100 = arith.constant 0 : index
    %c0_101 = arith.constant 0 : index
    %127 = vector.load %arg2[%c1_98, %c2_99, %c0_100, %c0_101] : memref<3x5x8x32xf32, #tpu.memory_space<vmem>>, vector<1x1x8x32xf32>
    %128 = vector.shape_cast %127 : vector<1x1x8x32xf32> to vector<8x32xf32>
    %129 = arith.addf %128, %112 : vector<8x32xf32>
    %130 = arith.negf %129 : vector<8x32xf32>
    %131 = math.exp %130 : vector<8x32xf32>
    %cst_102 = arith.constant 1.000000e+00 : f32
    %132 = vector.broadcast %cst_102 : f32 to vector<8x32xf32>
    %133 = arith.addf %132, %131 : vector<8x32xf32>
    %134 = arith.divf %132, %133 : vector<8x32xf32>
    %c2_103 = arith.constant 2 : index
    %c2_104 = arith.constant 2 : index
    %c0_105 = arith.constant 0 : index
    %c0_106 = arith.constant 0 : index
    %135 = vector.load %arg2[%c2_103, %c2_104, %c0_105, %c0_106] : memref<3x5x8x32xf32, #tpu.memory_space<vmem>>, vector<1x1x8x32xf32>
    %136 = vector.shape_cast %135 : vector<1x1x8x32xf32> to vector<8x32xf32>
    %137 = arith.mulf %126, %118 : vector<8x32xf32>
    %138 = arith.addf %136, %137 : vector<8x32xf32>
    %139 = math.tanh %138 : vector<8x32xf32>
    %cst_107 = arith.constant 1.000000e+00 : f32
    %140 = vector.broadcast %cst_107 : f32 to vector<8x32xf32>
    %141 = arith.subf %140, %134 : vector<8x32xf32>
    %142 = arith.mulf %141, %139 : vector<8x32xf32>
    %143 = arith.mulf %134, %93 : vector<8x32xf32>
    %144 = arith.addf %142, %143 : vector<8x32xf32>
    %c2_108 = arith.constant 2 : index
    %c0_109 = arith.constant 0 : index
    %c0_110 = arith.constant 0 : index
    %145 = vector.load %arg8[%c2_108, %c0_109, %c0_110] : memref<5x8x32xf32, #tpu.memory_space<vmem>>, vector<1x8x32xf32>
    %146 = vector.shape_cast %145 : vector<1x8x32xf32> to vector<8x32xf32>
    %147 = vector.shape_cast %144 : vector<8x32xf32> to vector<1x8x32xf32>
    tpu.vector_store %arg8[%c2_108, %c0_109, %c0_110], %147 {strides = array<i32>} : memref<5x8x32xf32, #tpu.memory_space<vmem>>, vector<1x8x32xf32>,
    %148 = arith.truncf %144 : vector<8x32xf32> to vector<8x32xbf16>
    %c0_111 = arith.constant 0 : index
    %c0_112 = arith.constant 0 : index
    %149 = vector.load %arg6[%c0_111, %c0_112] : memref<32x6xbf16, #tpu.memory_space<vmem>>, vector<32x6xbf16>
    %cst_113 = arith.constant dense<0.000000e+00> : vector<8x6xf32>
    %150 = tpu.matmul %148, %149, %cst_113 {dimension_numbers = #tpu.dot_dimension_numbers<[1], [0], [0], [1], [0, 0, 1, 1], [], []>} : vector<8x32xbf16>, vector<32x6xbf16>, vector<8x6xf32> -> vector<8x6xf32>
    %c0_114 = arith.constant 0 : index
    %c0_115 = arith.constant 0 : index
    %151 = vector.load %arg7[%c0_114, %c0_115] : memref<1x6xf32, #tpu.memory_space<vmem>>, vector<1x6xf32>
    %152 = vector.broadcast %151 : vector<1x6xf32> to vector<8x6xf32>
    %153 = arith.addf %150, %152 : vector<8x6xf32>
    %c2_116 = arith.constant 2 : index
    %c0_117 = arith.constant 0 : index
    %c0_118 = arith.constant 0 : index
    %154 = vector.load %arg9[%c2_116, %c0_117, %c0_118] : memref<5x8x6xf32, #tpu.memory_space<vmem>>, vector<1x8x6xf32>
    %155 = vector.shape_cast %154 : vector<1x8x6xf32> to vector<8x6xf32>
    %156 = vector.shape_cast %153 : vector<8x6xf32> to vector<1x8x6xf32>
    tpu.vector_store %arg9[%c2_116, %c0_117, %c0_118], %156 {strides = array<i32>} : memref<5x8x6xf32, #tpu.memory_space<vmem>>, vector<1x8x6xf32>,
    %157 = arith.truncf %144 : vector<8x32xf32> to vector<8x32xbf16>
    %c0_119 = arith.constant 0 : index
    %c0_120 = arith.constant 0 : index
    %c0_121 = arith.constant 0 : index
    %158 = vector.load %arg4[%c0_119, %c0_120, %c0_121] : memref<3x32x32xbf16, #tpu.memory_space<vmem>>, vector<1x32x32xbf16>
    %159 = vector.shape_cast %158 : vector<1x32x32xbf16> to vector<32x32xbf16>
    %cst_122 = arith.constant dense<0.000000e+00> : vector<8x32xf32>
    %160 = tpu.matmul %157, %159, %cst_122 {dimension_numbers = #tpu.dot_dimension_numbers<[1], [0], [0], [1], [0, 0, 1, 1], [], []>} : vector<8x32xbf16>, vector<32x32xbf16>, vector<8x32xf32> -> vector<8x32xf32>
    %c1_123 = arith.constant 1 : index
    %c0_124 = arith.constant 0 : index
    %c0_125 = arith.constant 0 : index
    %161 = vector.load %arg4[%c1_123, %c0_124, %c0_125] : memref<3x32x32xbf16, #tpu.memory_space<vmem>>, vector<1x32x32xbf16>
    %162 = vector.shape_cast %161 : vector<1x32x32xbf16> to vector<32x32xbf16>
    %cst_126 = arith.constant dense<0.000000e+00> : vector<8x32xf32>
    %163 = tpu.matmul %157, %162, %cst_126 {dimension_numbers = #tpu.dot_dimension_numbers<[1], [0], [0], [1], [0, 0, 1, 1], [], []>} : vector<8x32xbf16>, vector<32x32xbf16>, vector<8x32xf32> -> vector<8x32xf32>
    %c2_127 = arith.constant 2 : index
    %c0_128 = arith.constant 0 : index
    %c0_129 = arith.constant 0 : index
    %164 = vector.load %arg4[%c2_127, %c0_128, %c0_129] : memref<3x32x32xbf16, #tpu.memory_space<vmem>>, vector<1x32x32xbf16>
    %165 = vector.shape_cast %164 : vector<1x32x32xbf16> to vector<32x32xbf16>
    %cst_130 = arith.constant dense<0.000000e+00> : vector<8x32xf32>
    %166 = tpu.matmul %157, %165, %cst_130 {dimension_numbers = #tpu.dot_dimension_numbers<[1], [0], [0], [1], [0, 0, 1, 1], [], []>} : vector<8x32xbf16>, vector<32x32xbf16>, vector<8x32xf32> -> vector<8x32xf32>
    %c0_131 = arith.constant 0 : index
    %c0_132 = arith.constant 0 : index
    %167 = vector.load %arg5[%c0_131, %c0_132] : memref<1x32xf32, #tpu.memory_space<vmem>>, vector<1x32xf32>
    %168 = vector.broadcast %167 : vector<1x32xf32> to vector<8x32xf32>
    %169 = arith.addf %166, %168 : vector<8x32xf32>
    %c0_133 = arith.constant 0 : index
    %c3 = arith.constant 3 : index
    %c0_134 = arith.constant 0 : index
    %c0_135 = arith.constant 0 : index
    %170 = vector.load %arg2[%c0_133, %c3, %c0_134, %c0_135] : memref<3x5x8x32xf32, #tpu.memory_space<vmem>>, vector<1x1x8x32xf32>
    %171 = vector.shape_cast %170 : vector<1x1x8x32xf32> to vector<8x32xf32>
    %172 = arith.addf %171, %160 : vector<8x32xf32>
    %173 = arith.negf %172 : vector<8x32xf32>
    %174 = math.exp %173 : vector<8x32xf32>
    %cst_136 = arith.constant 1.000000e+00 : f32
    %175 = vector.broadcast %cst_136 : f32 to vector<8x32xf32>
    %176 = arith.addf %175, %174 : vector<8x32xf32>
    %177 = arith.divf %175, %176 : vector<8x32xf32>
    %c1_137 = arith.constant 1 : index
    %c3_138 = arith.constant 3 : index
    %c0_139 = arith.constant 0 : index
    %c0_140 = arith.constant 0 : index
    %178 = vector.load %arg2[%c1_137, %c3_138, %c0_139, %c0_140] : memref<3x5x8x32xf32, #tpu.memory_space<vmem>>, vector<1x1x8x32xf32>
    %179 = vector.shape_cast %178 : vector<1x1x8x32xf32> to vector<8x32xf32>
    %180 = arith.addf %179, %163 : vector<8x32xf32>
    %181 = arith.negf %180 : vector<8x32xf32>
    %182 = math.exp %181 : vector<8x32xf32>
    %cst_141 = arith.constant 1.000000e+00 : f32
    %183 = vector.broadcast %cst_141 : f32 to vector<8x32xf32>
    %184 = arith.addf %183, %182 : vector<8x32xf32>
    %185 = arith.divf %183, %184 : vector<8x32xf32>
    %c2_142 = arith.constant 2 : index
    %c3_143 = arith.constant 3 : index
    %c0_144 = arith.constant 0 : index
    %c0_145 = arith.constant 0 : index
    %186 = vector.load %arg2[%c2_142, %c3_143, %c0_144, %c0_145] : memref<3x5x8x32xf32, #tpu.memory_space<vmem>>, vector<1x1x8x32xf32>
    %187 = vector.shape_cast %186 : vector<1x1x8x32xf32> to vector<8x32xf32>
    %188 = arith.mulf %177, %169 : vector<8x32xf32>
    %189 = arith.addf %187, %188 : vector<8x32xf32>
    %190 = math.tanh %189 : vector<8x32xf32>
    %cst_146 = arith.constant 1.000000e+00 : f32
    %191 = vector.broadcast %cst_146 : f32 to vector<8x32xf32>
    %192 = arith.subf %191, %185 : vector<8x32xf32>
    %193 = arith.mulf %192, %190 : vector<8x32xf32>
    %194 = arith.mulf %185, %144 : vector<8x32xf32>
    %195 = arith.addf %193, %194 : vector<8x32xf32>
    %c3_147 = arith.constant 3 : index
    %c0_148 = arith.constant 0 : index
    %c0_149 = arith.constant 0 : index
    %196 = vector.load %arg8[%c3_147, %c0_148, %c0_149] : memref<5x8x32xf32, #tpu.memory_space<vmem>>, vector<1x8x32xf32>
    %197 = vector.shape_cast %196 : vector<1x8x32xf32> to vector<8x32xf32>
    %198 = vector.shape_cast %195 : vector<8x32xf32> to vector<1x8x32xf32>
    tpu.vector_store %arg8[%c3_147, %c0_148, %c0_149], %198 {strides = array<i32>} : memref<5x8x32xf32, #tpu.memory_space<vmem>>, vector<1x8x32xf32>,
    %199 = arith.truncf %195 : vector<8x32xf32> to vector<8x32xbf16>
    %c0_150 = arith.constant 0 : index
    %c0_151 = arith.constant 0 : index
    %200 = vector.load %arg6[%c0_150, %c0_151] : memref<32x6xbf16, #tpu.memory_space<vmem>>, vector<32x6xbf16>
    %cst_152 = arith.constant dense<0.000000e+00> : vector<8x6xf32>
    %201 = tpu.matmul %199, %200, %cst_152 {dimension_numbers = #tpu.dot_dimension_numbers<[1], [0], [0], [1], [0, 0, 1, 1], [], []>} : vector<8x32xbf16>, vector<32x6xbf16>, vector<8x6xf32> -> vector<8x6xf32>
    %c0_153 = arith.constant 0 : index
    %c0_154 = arith.constant 0 : index
    %202 = vector.load %arg7[%c0_153, %c0_154] : memref<1x6xf32, #tpu.memory_space<vmem>>, vector<1x6xf32>
    %203 = vector.broadcast %202 : vector<1x6xf32> to vector<8x6xf32>
    %204 = arith.addf %201, %203 : vector<8x6xf32>
    %c3_155 = arith.constant 3 : index
    %c0_156 = arith.constant 0 : index
    %c0_157 = arith.constant 0 : index
    %205 = vector.load %arg9[%c3_155, %c0_156, %c0_157] : memref<5x8x6xf32, #tpu.memory_space<vmem>>, vector<1x8x6xf32>
    %206 = vector.shape_cast %205 : vector<1x8x6xf32> to vector<8x6xf32>
    %207 = vector.shape_cast %204 : vector<8x6xf32> to vector<1x8x6xf32>
    tpu.vector_store %arg9[%c3_155, %c0_156, %c0_157], %207 {strides = array<i32>} : memref<5x8x6xf32, #tpu.memory_space<vmem>>, vector<1x8x6xf32>,
    %208 = arith.truncf %195 : vector<8x32xf32> to vector<8x32xbf16>
    %c0_158 = arith.constant 0 : index
    %c0_159 = arith.constant 0 : index
    %c0_160 = arith.constant 0 : index
    %209 = vector.load %arg4[%c0_158, %c0_159, %c0_160] : memref<3x32x32xbf16, #tpu.memory_space<vmem>>, vector<1x32x32xbf16>
    %210 = vector.shape_cast %209 : vector<1x32x32xbf16> to vector<32x32xbf16>
    %cst_161 = arith.constant dense<0.000000e+00> : vector<8x32xf32>
    %211 = tpu.matmul %208, %210, %cst_161 {dimension_numbers = #tpu.dot_dimension_numbers<[1], [0], [0], [1], [0, 0, 1, 1], [], []>} : vector<8x32xbf16>, vector<32x32xbf16>, vector<8x32xf32> -> vector<8x32xf32>
    %c1_162 = arith.constant 1 : index
    %c0_163 = arith.constant 0 : index
    %c0_164 = arith.constant 0 : index
    %212 = vector.load %arg4[%c1_162, %c0_163, %c0_164] : memref<3x32x32xbf16, #tpu.memory_space<vmem>>, vector<1x32x32xbf16>
    %213 = vector.shape_cast %212 : vector<1x32x32xbf16> to vector<32x32xbf16>
    %cst_165 = arith.constant dense<0.000000e+00> : vector<8x32xf32>
    %214 = tpu.matmul %208, %213, %cst_165 {dimension_numbers = #tpu.dot_dimension_numbers<[1], [0], [0], [1], [0, 0, 1, 1], [], []>} : vector<8x32xbf16>, vector<32x32xbf16>, vector<8x32xf32> -> vector<8x32xf32>
    %c2_166 = arith.constant 2 : index
    %c0_167 = arith.constant 0 : index
    %c0_168 = arith.constant 0 : index
    %215 = vector.load %arg4[%c2_166, %c0_167, %c0_168] : memref<3x32x32xbf16, #tpu.memory_space<vmem>>, vector<1x32x32xbf16>
    %216 = vector.shape_cast %215 : vector<1x32x32xbf16> to vector<32x32xbf16>
    %cst_169 = arith.constant dense<0.000000e+00> : vector<8x32xf32>
    %217 = tpu.matmul %208, %216, %cst_169 {dimension_numbers = #tpu.dot_dimension_numbers<[1], [0], [0], [1], [0, 0, 1, 1], [], []>} : vector<8x32xbf16>, vector<32x32xbf16>, vector<8x32xf32> -> vector<8x32xf32>
    %c0_170 = arith.constant 0 : index
    %c0_171 = arith.constant 0 : index
    %218 = vector.load %arg5[%c0_170, %c0_171] : memref<1x32xf32, #tpu.memory_space<vmem>>, vector<1x32xf32>
    %219 = vector.broadcast %218 : vector<1x32xf32> to vector<8x32xf32>
    %220 = arith.addf %217, %219 : vector<8x32xf32>
    %c0_172 = arith.constant 0 : index
    %c4 = arith.constant 4 : index
    %c0_173 = arith.constant 0 : index
    %c0_174 = arith.constant 0 : index
    %221 = vector.load %arg2[%c0_172, %c4, %c0_173, %c0_174] : memref<3x5x8x32xf32, #tpu.memory_space<vmem>>, vector<1x1x8x32xf32>
    %222 = vector.shape_cast %221 : vector<1x1x8x32xf32> to vector<8x32xf32>
    %223 = arith.addf %222, %211 : vector<8x32xf32>
    %224 = arith.negf %223 : vector<8x32xf32>
    %225 = math.exp %224 : vector<8x32xf32>
    %cst_175 = arith.constant 1.000000e+00 : f32
    %226 = vector.broadcast %cst_175 : f32 to vector<8x32xf32>
    %227 = arith.addf %226, %225 : vector<8x32xf32>
    %228 = arith.divf %226, %227 : vector<8x32xf32>
    %c1_176 = arith.constant 1 : index
    %c4_177 = arith.constant 4 : index
    %c0_178 = arith.constant 0 : index
    %c0_179 = arith.constant 0 : index
    %229 = vector.load %arg2[%c1_176, %c4_177, %c0_178, %c0_179] : memref<3x5x8x32xf32, #tpu.memory_space<vmem>>, vector<1x1x8x32xf32>
    %230 = vector.shape_cast %229 : vector<1x1x8x32xf32> to vector<8x32xf32>
    %231 = arith.addf %230, %214 : vector<8x32xf32>
    %232 = arith.negf %231 : vector<8x32xf32>
    %233 = math.exp %232 : vector<8x32xf32>
    %cst_180 = arith.constant 1.000000e+00 : f32
    %234 = vector.broadcast %cst_180 : f32 to vector<8x32xf32>
    %235 = arith.addf %234, %233 : vector<8x32xf32>
    %236 = arith.divf %234, %235 : vector<8x32xf32>
    %c2_181 = arith.constant 2 : index
    %c4_182 = arith.constant 4 : index
    %c0_183 = arith.constant 0 : index
    %c0_184 = arith.constant 0 : index
    %237 = vector.load %arg2[%c2_181, %c4_182, %c0_183, %c0_184] : memref<3x5x8x32xf32, #tpu.memory_space<vmem>>, vector<1x1x8x32xf32>
    %238 = vector.shape_cast %237 : vector<1x1x8x32xf32> to vector<8x32xf32>
    %239 = arith.mulf %228, %220 : vector<8x32xf32>
    %240 = arith.addf %238, %239 : vector<8x32xf32>
    %241 = math.tanh %240 : vector<8x32xf32>
    %cst_185 = arith.constant 1.000000e+00 : f32
    %242 = vector.broadcast %cst_185 : f32 to vector<8x32xf32>
    %243 = arith.subf %242, %236 : vector<8x32xf32>
    %244 = arith.mulf %243, %241 : vector<8x32xf32>
    %245 = arith.mulf %236, %195 : vector<8x32xf32>
    %246 = arith.addf %244, %245 : vector<8x32xf32>
    %c4_186 = arith.constant 4 : index
    %c0_187 = arith.constant 0 : index
    %c0_188 = arith.constant 0 : index
    %247 = vector.load %arg8[%c4_186, %c0_187, %c0_188] : memref<5x8x32xf32, #tpu.memory_space<vmem>>, vector<1x8x32xf32>
    %248 = vector.shape_cast %247 : vector<1x8x32xf32> to vector<8x32xf32>
    %249 = vector.shape_cast %246 : vector<8x32xf32> to vector<1x8x32xf32>
    tpu.vector_store %arg8[%c4_186, %c0_187, %c0_188], %249 {strides = array<i32>} : memref<5x8x32xf32, #tpu.memory_space<vmem>>, vector<1x8x32xf32>,
    %250 = arith.truncf %246 : vector<8x32xf32> to vector<8x32xbf16>
    %c0_189 = arith.constant 0 : index
    %c0_190 = arith.constant 0 : index
    %251 = vector.load %arg6[%c0_189, %c0_190] : memref<32x6xbf16, #tpu.memory_space<vmem>>, vector<32x6xbf16>
    %cst_191 = arith.constant dense<0.000000e+00> : vector<8x6xf32>
    %252 = tpu.matmul %250, %251, %cst_191 {dimension_numbers = #tpu.dot_dimension_numbers<[1], [0], [0], [1], [0, 0, 1, 1], [], []>} : vector<8x32xbf16>, vector<32x6xbf16>, vector<8x6xf32> -> vector<8x6xf32>
    %c0_192 = arith.constant 0 : index
    %c0_193 = arith.constant 0 : index
    %253 = vector.load %arg7[%c0_192, %c0_193] : memref<1x6xf32, #tpu.memory_space<vmem>>, vector<1x6xf32>
    %254 = vector.broadcast %253 : vector<1x6xf32> to vector<8x6xf32>
    %255 = arith.addf %252, %254 : vector<8x6xf32>
    %c4_194 = arith.constant 4 : index
    %c0_195 = arith.constant 0 : index
    %c0_196 = arith.constant 0 : index
    %256 = vector.load %arg9[%c4_194, %c0_195, %c0_196] : memref<5x8x6xf32, #tpu.memory_space<vmem>>, vector<1x8x6xf32>
    %257 = vector.shape_cast %256 : vector<1x8x6xf32> to vector<8x6xf32>
    %258 = vector.shape_cast %255 : vector<8x6xf32> to vector<1x8x6xf32>
    tpu.vector_store %arg9[%c4_194, %c0_195, %c0_196], %258 {strides = array<i32>} : memref<5x8x6xf32, #tpu.memory_space<vmem>>, vector<1x8x6xf32>,
    %c0_197 = arith.constant 0 : index
    %c0_198 = arith.constant 0 : index
    %259 = vector.load %arg10[%c0_197, %c0_198] : memref<8x32xf32, #tpu.memory_space<vmem>>, vector<8x32xf32>
    tpu.vector_store %arg10[%c0_197, %c0_198], %246 {strides = array<i32>} : memref<8x32xf32, #tpu.memory_space<vmem>>, vector<8x32xf32>,
    return
  }
  func.func @transform_0(%arg0: i32, %arg1: i32) -> (i32, i32, i32, i32) {
    %c0_i32 = arith.constant 0 : i32
    %c0_i32_0 = arith.constant 0 : i32
    %c0_i32_1 = arith.constant 0 : i32
    return %c0_i32, %arg1, %arg0, %c0_i32_0 : i32, i32, i32, i32
  }
  func.func @transform_1(%arg0: i32, %arg1: i32) -> (i32, i32) {
    %c0_i32 = arith.constant 0 : i32
    %c0_i32_0 = arith.constant 0 : i32
    return %arg0, %c0_i32 : i32, i32
  }
  func.func @transform_2(%arg0: i32, %arg1: i32) -> (i32, i32, i32) {
    %c0_i32 = arith.constant 0 : i32
    %c0_i32_0 = arith.constant 0 : i32
    %c0_i32_1 = arith.constant 0 : i32
    %c0_i32_2 = arith.constant 0 : i32
    return %c0_i32, %c0_i32_0, %c0_i32_1 : i32, i32, i32
  }
  func.func @transform_3(%arg0: i32, %arg1: i32) -> (i32, i32) {
    %c0_i32 = arith.constant 0 : i32
    %c0_i32_0 = arith.constant 0 : i32
    %c0_i32_1 = arith.constant 0 : i32
    return %c0_i32, %c0_i32_0 : i32, i32
  }
  func.func @transform_4(%arg0: i32, %arg1: i32) -> (i32, i32) {
    %c0_i32 = arith.constant 0 : i32
    %c0_i32_0 = arith.constant 0 : i32
    %c0_i32_1 = arith.constant 0 : i32
    return %c0_i32, %c0_i32_0 : i32, i32
  }
  func.func @transform_5(%arg0: i32, %arg1: i32) -> (i32, i32) {
    %c0_i32 = arith.constant 0 : i32
    %c0_i32_0 = arith.constant 0 : i32
    %c0_i32_1 = arith.constant 0 : i32
    return %c0_i32, %c0_i32_0 : i32, i32
  }
  func.func @transform_6(%arg0: i32, %arg1: i32) -> (i32, i32, i32) {
    %c0_i32 = arith.constant 0 : i32
    %c0_i32_0 = arith.constant 0 : i32
    return %arg1, %arg0, %c0_i32 : i32, i32, i32
  }
  func.func @transform_7(%arg0: i32, %arg1: i32) -> (i32, i32, i32) {
    %c0_i32 = arith.constant 0 : i32
    %c0_i32_0 = arith.constant 0 : i32
    return %arg1, %arg0, %c0_i32 : i32, i32, i32
  }
}

</mosaic_0001>

<llo_original>
// kernel: rnn_icm_agent_forward.2
$region0: #{rnn_icm_agent_forward.2}
  #allocation0 [shape = 'u32[]', space=smem, size = 0x4, offset = 0x4, fixed_abs, tag = 'smem constant byte address 0x4 - core index']
  #allocation1 [shape = 'u32[144,128]{1,0:T(1,128)}', space=vmem, size = 0x12000, scoped, tag = 'internal scratch']
  %s0 = inlined_call_operand.vmem [shape: bf16[40,16], index: 0, kind: input, shape index: {}]
  %s1 = inlined_call_operand.vmem [shape: bf16[16,64], index: 1, kind: input, shape index: {}]
  %s2 = inlined_call_operand.vmem [shape: f32[1,64], index: 2, kind: input, shape index: {}]
  %s3 = inlined_call_operand.vmem [shape: bf16[64,32], index: 3, kind: input, shape index: {}]
  %s4 = inlined_call_operand.vmem [shape: f32[1,32], index: 4, kind: input, shape index: {}]
  %s5 = inlined_call_operand.vmem [shape: bf16[3,32,32], index: 5, kind: input, shape index: {}]
  %s6 = inlined_call_operand.vmem [shape: f32[3,1,32], index: 6, kind: input, shape index: {}]
  %s7 = inlined_call_operand.vmem [shape: f32[3,40,32], index: 7, kind: output, shape index: {}]
  %s8 = sld [smem:[#allocation0]]
  $region38: #{rnn_icm_agent_forward.2} parent=0
    _
  %s10 = ssub.s32 1, %s8
  %s11 = scalar_select 0, %s10, %s8
  // Predicated region
  $region2: #{rnn_icm_agent_forward.2} parent=0 // pred_check
    _
  $region3: #{rnn_icm_agent_forward.2} parent=0 // pred_check_branch
    %13 = sbr.rel (0) target = $region5
  $region4: #{rnn_icm_agent_forward.2} parent=0 // pred_region
    _
  $region5: #{rnn_icm_agent_forward.2} parent=0 // pred_fallthru
    _
  // Predicated region
  $region6: #{rnn_icm_agent_forward.2} parent=0 // pred_check
    _
  $region7: #{rnn_icm_agent_forward.2} parent=0 // pred_check_branch
    %15 = sbr.rel (0) target = $region9
  $region8: #{rnn_icm_agent_forward.2} parent=0 // pred_region
    _
  $region9: #{rnn_icm_agent_forward.2} parent=0 // pred_fallthru
    _
  // Predicated region
  $region10: #{rnn_icm_agent_forward.2} parent=0 // pred_check
    _
  $region11: #{rnn_icm_agent_forward.2} parent=0 // pred_check_branch
    %17 = sbr.rel (0) target = $region13
  $region12: #{rnn_icm_agent_forward.2} parent=0 // pred_region
    _
  $region13: #{rnn_icm_agent_forward.2} parent=0 // pred_fallthru
    _
  // Predicated region
  $region14: #{rnn_icm_agent_forward.2} parent=0 // pred_check
    _
  $region15: #{rnn_icm_agent_forward.2} parent=0 // pred_check_branch
    %19 = sbr.rel (0) target = $region17
  $region16: #{rnn_icm_agent_forward.2} parent=0 // pred_region
    _
  $region17: #{rnn_icm_agent_forward.2} parent=0 // pred_fallthru
    _
  // Predicated region
  $region18: #{rnn_icm_agent_forward.2} parent=0 // pred_check
    _
  $region19: #{rnn_icm_agent_forward.2} parent=0 // pred_check_branch
    %21 = sbr.rel (0) target = $region21
  $region20: #{rnn_icm_agent_forward.2} parent=0 // pred_region
    _
  $region21: #{rnn_icm_agent_forward.2} parent=0 // pred_fallthru
    _
  // Predicated region
  $region22: #{rnn_icm_agent_forward.2} parent=0 // pred_check
    _
  $region23: #{rnn_icm_agent_forward.2} parent=0 // pred_check_branch
    %23 = sbr.rel (0) target = $region25
  $region24: #{rnn_icm_agent_forward.2} parent=0 // pred_region
    _
  $region25: #{rnn_icm_agent_forward.2} parent=0 // pred_fallthru
    _
  // Predicated region
  $region26: #{rnn_icm_agent_forward.2} parent=0 // pred_check
    _
  $region27: #{rnn_icm_agent_forward.2} parent=0 // pred_check_branch
    %25 = sbr.rel (0) target = $region29
  $region28: #{rnn_icm_agent_forward.2} parent=0 // pred_region
    _
  $region29: #{rnn_icm_agent_forward.2} parent=0 // pred_fallthru
    _
  %v27 = vld [vmem:[%s0] sm:$0xf]
  %v28 = vld [vmem:[%s0 + $0x4] sm:$0xf]
  %v29 = vld [vmem:[%s0 + $0x8] sm:$0xf]
  %v30 = vld [vmem:[%s0 + $0xc] sm:$0xf]
  %v31 = vld [vmem:[%s0 + $0x10] sm:$0xf]
  %v32 = vld [vmem:[%s1] sm:$0xf]
  %v33 = vld [vmem:[%s1 + $0x4] sm:$0xf]
  %v34 = vld [vmem:[%s2] sm:$0x1]
  %v36 = vlaneseq
  %v37 = vshrl.u32 %v36, 7
  %v38 = vsub.s32 0, %v37
  %v39 = vrot.slane %v34, %v38
  %v46 = vunpack.c.l.b16 %v27
  %v47 = vunpack.c.l.b16 %v28
  %v48 = vunpack.c.l.b16 %v29
  %v49 = vunpack.c.l.b16 %v30
  %v50 = vunpack.c.l.b16 %v31
  %v51 = vpack.c.b16 %v47, %v46
  %v52 = vpack.c.b16 %v49, %v48
  %v53 = vpack.c.b16 %v50, %v50
  %v56 = vunpack.c.l.b16 %v32
  %v57 = vunpack.c.l.b16 %v33
  %v58 = vpack.c.b16 %v57, %v56
  %vm60 = vcmask 130048
  %v62 = vsel %vm60, %v51, 0
  %v65 = vsel %vm60, %v52, 0
  %v68 = vsel %vm60, %v53, 0
  %70 = vmatprep.subr.bf16.mxu0 0
  %71 = vmatpush1.bf16.msra.mxu0 %v58
  %72 = vmatprep.subr.bf16.mxu0 0
  %73 = vmatpush1.bf16.msra.mxu0 0
  %74 = vmatprep.subr.bf16.mxu0 0
  %75 = vmatpush1.bf16.msra.mxu0 0
  %76 = vmatprep.subr.bf16.mxu0 0
  %77 = vmatpush1.bf16.msra.mxu0 0
  %78 = vmatprep.subr.bf16.mxu0 0
  %79 = vmatpush1.bf16.msra.mxu0 0
  %80 = vmatprep.subr.bf16.mxu0 0
  %81 = vmatpush1.bf16.msra.mxu0 0
  %82 = vmatprep.subr.bf16.mxu0 0
  %83 = vmatpush1.bf16.msra.mxu0 0
  %84 = vmatprep.subr.bf16.mxu0 0
  %85 = vmatpush1.bf16.msra.mxu0 0
  %86 = vmatprep.subr.bf16.mxu0 0
  %87 = vmatpush1.bf16.msra.mxu0 0
  %88 = vmatprep.subr.bf16.mxu0 0
  %89 = vmatpush1.bf16.msra.mxu0 0
  %90 = vmatprep.subr.bf16.mxu0 0
  %91 = vmatpush1.bf16.msra.mxu0 0
  %92 = vmatprep.subr.bf16.mxu0 0
  %93 = vmatpush1.bf16.msra.mxu0 0
  %94 = vmatprep.subr.bf16.mxu0 0
  %95 = vmatpush1.bf16.msra.mxu0 0
  %96 = vmatprep.subr.bf16.mxu0 0
  %97 = vmatpush1.bf16.msra.mxu0 0
  %98 = vmatprep.subr.bf16.mxu0 0
  %99 = vmatpush1.bf16.msra.mxu0 0
  %100 = vmatprep.subr.bf16.mxu0 0
  %101 = vmatpush1.bf16.msra.mxu0 0
  %102 = vmatprep.mubr.bf16.mxu0 0
  %103 = vmatmul.mubr.bf16.gmra.mrb[0].mxu0 %v62
  %v104 = vpop.f32.mrb[0].mxu0
  %v105 = vadd.f32 %v39, %v104
  %v106 = vpop.f32.mrb[0].mxu0
  %v107 = vpop.f32.mrb[0].mxu0
  %v108 = vadd.f32 %v39, %v107
  %v109 = vpop.f32.mrb[0].mxu0
  %110 = vmatprep.mubr.bf16.mxu0 0
  %111 = vmatmul.mubr.bf16.gmra.mrb[0].mxu0 %v65
  %v112 = vpop.f32.mrb[0].mxu0
  %v113 = vadd.f32 %v39, %v112
  %v114 = vpop.f32.mrb[0].mxu0
  %v115 = vpop.f32.mrb[0].mxu0
  %v116 = vadd.f32 %v39, %v115
  %v117 = vpop.f32.mrb[0].mxu0
  %118 = vmatprep.mubr.bf16.mxu0 0
  %119 = vmatmul.mubr.bf16.gmra.mrb[0].mxu0 %v68
  %v120 = vpop.f32.mrb[0].mxu0
  %v121 = vadd.f32 %v39, %v120
  %v122 = vpop.f32.mrb[0].mxu0
  %v123 = vpop.f32.mrb[0].mxu0
  %v124 = vpop.f32.mrb[0].mxu0
  %125 = vdwg.mxu0
  %v126 = vmax.f32 %v105, 0.0
  %v127 = vmax.f32 %v108, 0.0
  %v128 = vmax.f32 %v113, 0.0
  %v129 = vmax.f32 %v116, 0.0
  %v130 = vmax.f32 %v121, 0.0
  %v131 = vpack.c.bf16 %v127, %v126
  %v132 = vpack.c.bf16 %v129, %v128
  %v133 = vpack.c.bf16 %v130, %v130
  %v134 = vld [vmem:[%s3] sm:$0xf]
  %v135 = vld [vmem:[%s3 + $0x4] sm:$0xf]
  %v136 = vld [vmem:[%s3 + $0x8] sm:$0xf]
  %v137 = vld [vmem:[%s3 + $0xc] sm:$0xf]
  %v138 = vld [vmem:[%s3 + $0x10] sm:$0xf]
  %v139 = vld [vmem:[%s3 + $0x14] sm:$0xf]
  %v140 = vld [vmem:[%s3 + $0x18] sm:$0xf]
  %v141 = vld [vmem:[%s3 + $0x1c] sm:$0xf]
  %v142 = vld [vmem:[%s4] sm:$0x1]
  %v144 = vlaneseq
  %v145 = vshrl.u32 %v144, 7
  %v146 = vsub.s32 0, %v145
  %v147 = vrot.slane %v142, %v146
  %v157 = vunpack.c.l.b16 %v134
  %v158 = vunpack.c.l.b16 %v135
  %v159 = vunpack.c.l.b16 %v136
  %v160 = vunpack.c.l.b16 %v137
  %v161 = vunpack.c.l.b16 %v138
  %v162 = vunpack.c.l.b16 %v139
  %v163 = vunpack.c.l.b16 %v140
  %v164 = vunpack.c.l.b16 %v141
  %v165 = vpack.c.b16 %v158, %v157
  %v166 = vpack.c.b16 %v160, %v159
  %v167 = vpack.c.b16 %v162, %v161
  %v168 = vpack.c.b16 %v164, %v163
  %vm173 = vcmask 523264
  %v175 = vsel %vm173, %v131, 0
  %v178 = vsel %vm173, %v132, 0
  %v181 = vsel %vm173, %v133, 0
  %183 = vmatprep.subr.bf16.mxu0 0
  %184 = vmatpush1.bf16.msra.mxu0 %v165
  %185 = vmatprep.subr.bf16.mxu0 0
  %186 = vmatpush1.bf16.msra.mxu0 %v166
  %187 = vmatprep.subr.bf16.mxu0 0
  %188 = vmatpush1.bf16.msra.mxu0 %v167
  %189 = vmatprep.subr.bf16.mxu0 0
  %190 = vmatpush1.bf16.msra.mxu0 %v168
  %191 = vmatprep.subr.bf16.mxu0 0
  %192 = vmatpush1.bf16.msra.mxu0 0
  %193 = vmatprep.subr.bf16.mxu0 0
  %194 = vmatpush1.bf16.msra.mxu0 0
  %195 = vmatprep.subr.bf16.mxu0 0
  %196 = vmatpush1.bf16.msra.mxu0 0
  %197 = vmatprep.subr.bf16.mxu0 0
  %198 = vmatpush1.bf16.msra.mxu0 0
  %199 = vmatprep.subr.bf16.mxu0 0
  %200 = vmatpush1.bf16.msra.mxu0 0
  %201 = vmatprep.subr.bf16.mxu0 0
  %202 = vmatpush1.bf16.msra.mxu0 0
  %203 = vmatprep.subr.bf16.mxu0 0
  %204 = vmatpush1.bf16.msra.mxu0 0
  %205 = vmatprep.subr.bf16.mxu0 0
  %206 = vmatpush1.bf16.msra.mxu0 0
  %207 = vmatprep.subr.bf16.mxu0 0
  %208 = vmatpush1.bf16.msra.mxu0 0
  %209 = vmatprep.subr.bf16.mxu0 0
  %210 = vmatpush1.bf16.msra.mxu0 0
  %211 = vmatprep.subr.bf16.mxu0 0
  %212 = vmatpush1.bf16.msra.mxu0 0
  %213 = vmatprep.subr.bf16.mxu0 0
  %214 = vmatpush1.bf16.msra.mxu0 0
  %215 = vmatprep.mubr.bf16.mxu0 0
  %216 = vmatmul.mubr.bf16.gmra.mrb[0].mxu0 %v175
  %v217 = vpop.f32.mrb[0].mxu0
  %v218 = vadd.f32 %v147, %v217
  %v219 = vpop.f32.mrb[0].mxu0
  %v220 = vpop.f32.mrb[0].mxu0
  %v221 = vadd.f32 %v147, %v220
  %v222 = vpop.f32.mrb[0].mxu0
  %223 = vmatprep.mubr.bf16.mxu0 0
  %224 = vmatmul.mubr.bf16.gmra.mrb[0].mxu0 %v178
  %v225 = vpop.f32.mrb[0].mxu0
  %v226 = vadd.f32 %v147, %v225
  %v227 = vpop.f32.mrb[0].mxu0
  %v228 = vpop.f32.mrb[0].mxu0
  %v229 = vadd.f32 %v147, %v228
  %v230 = vpop.f32.mrb[0].mxu0
  %231 = vmatprep.mubr.bf16.mxu0 0
  %232 = vmatmul.mubr.bf16.gmra.mrb[0].mxu0 %v181
  %v233 = vpop.f32.mrb[0].mxu0
  %v234 = vadd.f32 %v147, %v233
  %v235 = vpop.f32.mrb[0].mxu0
  %v236 = vpop.f32.mrb[0].mxu0
  %v237 = vpop.f32.mrb[0].mxu0
  %238 = vdwg.mxu0
  %v239 = vmax.f32 %v218, 0.0
  %v240 = vmax.f32 %v221, 0.0
  %v241 = vmax.f32 %v226, 0.0
  %v242 = vmax.f32 %v229, 0.0
  %v243 = vmax.f32 %v234, 0.0
  %v244 = vpack.c.bf16 %v240, %v239
  %v245 = vpack.c.bf16 %v242, %v241
  %v246 = vpack.c.bf16 %v243, %v243
  %v247 = vld [vmem:[%s5] sm:$0xf]
  %v248 = vld [vmem:[%s5 + $0x4] sm:$0xf]
  %v249 = vld [vmem:[%s5 + $0x8] sm:$0xf]
  %v250 = vld [vmem:[%s5 + $0xc] sm:$0xf]
  %v251 = vld [vmem:[%s6] sm:$0x1]
  %v253 = vlaneseq
  %v254 = vshrl.u32 %v253, 7
  %v255 = vsub.s32 0, %v254
  %v256 = vrot.slane %v251, %v255
  %v262 = vunpack.c.l.b16 %v247
  %v263 = vunpack.c.l.b16 %v248
  %v264 = vunpack.c.l.b16 %v249
  %v265 = vunpack.c.l.b16 %v250
  %v266 = vpack.c.b16 %v263, %v262
  %v267 = vpack.c.b16 %v265, %v264
  %vm270 = vcmask 261120
  %v272 = vsel %vm270, %v244, 0
  %v275 = vsel %vm270, %v245, 0
  %v278 = vsel %vm270, %v246, 0
  %280 = vmatprep.subr.bf16.mxu0 0
  %281 = vmatpush1.bf16.msra.mxu0 %v266
  %282 = vmatprep.subr.bf16.mxu0 0
  %283 = vmatpush1.bf16.msra.mxu0 %v267
  %284 = vmatprep.subr.bf16.mxu0 0
  %285 = vmatpush1.bf16.msra.mxu0 0
  %286 = vmatprep.subr.bf16.mxu0 0
  %287 = vmatpush1.bf16.msra.mxu0 0
  %288 = vmatprep.subr.bf16.mxu0 0
  %289 = vmatpush1.bf16.msra.mxu0 0
  %290 = vmatprep.subr.bf16.mxu0 0
  %291 = vmatpush1.bf16.msra.mxu0 0
  %292 = vmatprep.subr.bf16.mxu0 0
  %293 = vmatpush1.bf16.msra.mxu0 0
  %294 = vmatprep.subr.bf16.mxu0 0
  %295 = vmatpush1.bf16.msra.mxu0 0
  %296 = vmatprep.subr.bf16.mxu0 0
  %297 = vmatpush1.bf16.msra.mxu0 0
  %298 = vmatprep.subr.bf16.mxu0 0
  %299 = vmatpush1.bf16.msra.mxu0 0
  %300 = vmatprep.subr.bf16.mxu0 0
  %301 = vmatpush1.bf16.msra.mxu0 0
  %302 = vmatprep.subr.bf16.mxu0 0
  %303 = vmatpush1.bf16.msra.mxu0 0
  %304 = vmatprep.subr.bf16.mxu0 0
  %305 = vmatpush1.bf16.msra.mxu0 0
  %306 = vmatprep.subr.bf16.mxu0 0
  %307 = vmatpush1.bf16.msra.mxu0 0
  %308 = vmatprep.subr.bf16.mxu0 0
  %309 = vmatpush1.bf16.msra.mxu0 0
  %310 = vmatprep.subr.bf16.mxu0 0
  %311 = vmatpush1.bf16.msra.mxu0 0
  %312 = vmatprep.mubr.bf16.mxu0 0
  %313 = vmatmul.mubr.bf16.gmra.mrb[0].mxu0 %v272
  %v314 = vpop.f32.mrb[0].mxu0
  %v315 = vadd.f32 %v256, %v314
  %v316 = vpop.f32.mrb[0].mxu0
  %v317 = vpop.f32.mrb[0].mxu0
  %v318 = vadd.f32 %v256, %v317
  %v319 = vpop.f32.mrb[0].mxu0
  %320 = vmatprep.mubr.bf16.mxu0 0
  %321 = vmatmul.mubr.bf16.gmra.mrb[0].mxu0 %v275
  %v322 = vpop.f32.mrb[0].mxu0
  %v323 = vadd.f32 %v256, %v322
  %v324 = vpop.f32.mrb[0].mxu0
  %v325 = vpop.f32.mrb[0].mxu0
  %v326 = vadd.f32 %v256, %v325
  %v327 = vpop.f32.mrb[0].mxu0
  %328 = vmatprep.mubr.bf16.mxu0 0
  %329 = vmatmul.mubr.bf16.gmra.mrb[0].mxu0 %v278
  %v330 = vpop.f32.mrb[0].mxu0
  %v331 = vadd.f32 %v256, %v330
  %v332 = vpop.f32.mrb[0].mxu0
  %v333 = vpop.f32.mrb[0].mxu0
  %v334 = vpop.f32.mrb[0].mxu0
  %335 = vdwg.mxu0
  %336 = vst.msk [vmem:[%s7] sm:$0xff] %vm270, %v315
  %337 = vst.msk [vmem:[%s7 + $0x8] sm:$0xff] %vm270, %v318
  %338 = vst.msk [vmem:[%s7 + $0x10] sm:$0xff] %vm270, %v323
  %339 = vst.msk [vmem:[%s7 + $0x18] sm:$0xff] %vm270, %v326
  %340 = vst.msk [vmem:[%s7 + $0x20] sm:$0xff] %vm270, %v331
  %s341 = scalar_lea.vmem %s5, 16
  %v342 = vld [vmem:[%s341] sm:$0xf]
  %v343 = vld [vmem:[%s341 + $0x4] sm:$0xf]
  %v344 = vld [vmem:[%s341 + $0x8] sm:$0xf]
  %v345 = vld [vmem:[%s341 + $0xc] sm:$0xf]
  %s346 = scalar_lea.vmem %s6, 1
  %v347 = vld [vmem:[%s346] sm:$0x1]
  %v349 = vlaneseq
  %v350 = vshrl.u32 %v349, 7
  %v351 = vsub.s32 0, %v350
  %v352 = vrot.slane %v347, %v351
  %v358 = vunpack.c.l.b16 %v342
  %v359 = vunpack.c.l.b16 %v343
  %v360 = vunpack.c.l.b16 %v344
  %v361 = vunpack.c.l.b16 %v345
  %v362 = vpack.c.b16 %v359, %v358
  %v363 = vpack.c.b16 %v361, %v360
  %366 = vmatprep.subr.bf16.mxu0 0
  %367 = vmatpush1.bf16.msra.mxu0 %v362
  %368 = vmatprep.subr.bf16.mxu0 0
  %369 = vmatpush1.bf16.msra.mxu0 %v363
  %370 = vmatprep.subr.bf16.mxu0 0
  %371 = vmatpush1.bf16.msra.mxu0 0
  %372 = vmatprep.subr.bf16.mxu0 0
  %373 = vmatpush1.bf16.msra.mxu0 0
  %374 = vmatprep.subr.bf16.mxu0 0
  %375 = vmatpush1.bf16.msra.mxu0 0
  %376 = vmatprep.subr.bf16.mxu0 0
  %377 = vmatpush1.bf16.msra.mxu0 0
  %378 = vmatprep.subr.bf16.mxu0 0
  %379 = vmatpush1.bf16.msra.mxu0 0
  %380 = vmatprep.subr.bf16.mxu0 0
  %381 = vmatpush1.bf16.msra.mxu0 0
  %382 = vmatprep.subr.bf16.mxu0 0
  %383 = vmatpush1.bf16.msra.mxu0 0
  %384 = vmatprep.subr.bf16.mxu0 0
  %385 = vmatpush1.bf16.msra.mxu0 0
  %386 = vmatprep.subr.bf16.mxu0 0
  %387 = vmatpush1.bf16.msra.mxu0 0
  %388 = vmatprep.subr.bf16.mxu0 0
  %389 = vmatpush1.bf16.msra.mxu0 0
  %390 = vmatprep.subr.bf16.mxu0 0
  %391 = vmatpush1.bf16.msra.mxu0 0
  %392 = vmatprep.subr.bf16.mxu0 0
  %393 = vmatpush1.bf16.msra.mxu0 0
  %394 = vmatprep.subr.bf16.mxu0 0
  %395 = vmatpush1.bf16.msra.mxu0 0
  %396 = vmatprep.subr.bf16.mxu0 0
  %397 = vmatpush1.bf16.msra.mxu0 0
  %398 = vmatprep.mubr.bf16.mxu0 0
  %399 = vmatmul.mubr.bf16.gmra.mrb[0].mxu0 %v272
  %v400 = vpop.f32.mrb[0].mxu0
  %v401 = vadd.f32 %v352, %v400
  %v402 = vpop.f32.mrb[0].mxu0
  %v403 = vpop.f32.mrb[0].mxu0
  %v404 = vadd.f32 %v352, %v403
  %v405 = vpop.f32.mrb[0].mxu0
  %406 = vmatprep.mubr.bf16.mxu0 0
  %407 = vmatmul.mubr.bf16.gmra.mrb[0].mxu0 %v275
  %v408 = vpop.f32.mrb[0].mxu0
  %v409 = vadd.f32 %v352, %v408
  %v410 = vpop.f32.mrb[0].mxu0
  %v411 = vpop.f32.mrb[0].mxu0
  %v412 = vadd.f32 %v352, %v411
  %v413 = vpop.f32.mrb[0].mxu0
  %414 = vmatprep.mubr.bf16.mxu0 0
  %415 = vmatmul.mubr.bf16.gmra.mrb[0].mxu0 %v278
  %v416 = vpop.f32.mrb[0].mxu0
  %v417 = vadd.f32 %v352, %v416
  %v418 = vpop.f32.mrb[0].mxu0
  %v419 = vpop.f32.mrb[0].mxu0
  %v420 = vpop.f32.mrb[0].mxu0
  %421 = vdwg.mxu0
  %s422 = scalar_lea.vmem %s7, 40
  %423 = vst.msk [vmem:[%s422] sm:$0xff] %vm270, %v401
  %424 = vst.msk [vmem:[%s422 + $0x8] sm:$0xff] %vm270, %v404
  %425 = vst.msk [vmem:[%s422 + $0x10] sm:$0xff] %vm270, %v409
  %426 = vst.msk [vmem:[%s422 + $0x18] sm:$0xff] %vm270, %v412
  %427 = vst.msk [vmem:[%s422 + $0x20] sm:$0xff] %vm270, %v417
  %s428 = scalar_lea.vmem %s5, 32
  %v429 = vld [vmem:[%s428] sm:$0xf]
  %v430 = vld [vmem:[%s428 + $0x4] sm:$0xf]
  %v431 = vld [vmem:[%s428 + $0x8] sm:$0xf]
  %v432 = vld [vmem:[%s428 + $0xc] sm:$0xf]
  %s433 = scalar_lea.vmem %s6, 2
  %v434 = vld [vmem:[%s433] sm:$0x1]
  %v436 = vlaneseq
  %v437 = vshrl.u32 %v436, 7
  %v438 = vsub.s32 0, %v437
  %v439 = vrot.slane %v434, %v438
  %v445 = vunpack.c.l.b16 %v429
  %v446 = vunpack.c.l.b16 %v430
  %v447 = vunpack.c.l.b16 %v431
  %v448 = vunpack.c.l.b16 %v432
  %v449 = vpack.c.b16 %v446, %v445
  %v450 = vpack.c.b16 %v448, %v447
  %453 = vmatprep.subr.bf16.mxu0 0
  %454 = vmatpush1.bf16.msra.mxu0 %v449
  %455 = vmatprep.subr.bf16.mxu0 0
  %456 = vmatpush1.bf16.msra.mxu0 %v450
  %457 = vmatprep.subr.bf16.mxu0 0
  %458 = vmatpush1.bf16.msra.mxu0 0
  %459 = vmatprep.subr.bf16.mxu0 0
  %460 = vmatpush1.bf16.msra.mxu0 0
  %461 = vmatprep.subr.bf16.mxu0 0
  %462 = vmatpush1.bf16.msra.mxu0 0
  %463 = vmatprep.subr.bf16.mxu0 0
  %464 = vmatpush1.bf16.msra.mxu0 0
  %465 = vmatprep.subr.bf16.mxu0 0
  %466 = vmatpush1.bf16.msra.mxu0 0
  %467 = vmatprep.subr.bf16.mxu0 0
  %468 = vmatpush1.bf16.msra.mxu0 0
  %469 = vmatprep.subr.bf16.mxu0 0
  %470 = vmatpush1.bf16.msra.mxu0 0
  %471 = vmatprep.subr.bf16.mxu0 0
  %472 = vmatpush1.bf16.msra.mxu0 0
  %473 = vmatprep.subr.bf16.mxu0 0
  %474 = vmatpush1.bf16.msra.mxu0 0
  %475 = vmatprep.subr.bf16.mxu0 0
  %476 = vmatpush1.bf16.msra.mxu0 0
  %477 = vmatprep.subr.bf16.mxu0 0
  %478 = vmatpush1.bf16.msra.mxu0 0
  %479 = vmatprep.subr.bf16.mxu0 0
  %480 = vmatpush1.bf16.msra.mxu0 0
  %481 = vmatprep.subr.bf16.mxu0 0
  %482 = vmatpush1.bf16.msra.mxu0 0
  %483 = vmatprep.subr.bf16.mxu0 0
  %484 = vmatpush1.bf16.msra.mxu0 0
  %485 = vmatprep.mubr.bf16.mxu0 0
  %486 = vmatmul.mubr.bf16.gmra.mrb[0].mxu0 %v272
  %v487 = vpop.f32.mrb[0].mxu0
  %v488 = vadd.f32 %v439, %v487
  %v489 = vpop.f32.mrb[0].mxu0
  %v490 = vpop.f32.mrb[0].mxu0
  %v491 = vadd.f32 %v439, %v490
  %v492 = vpop.f32.mrb[0].mxu0
  %493 = vmatprep.mubr.bf16.mxu0 0
  %494 = vmatmul.mubr.bf16.gmra.mrb[0].mxu0 %v275
  %v495 = vpop.f32.mrb[0].mxu0
  %v496 = vadd.f32 %v439, %v495
  %v497 = vpop.f32.mrb[0].mxu0
  %v498 = vpop.f32.mrb[0].mxu0
  %v499 = vadd.f32 %v439, %v498
  %v500 = vpop.f32.mrb[0].mxu0
  %501 = vmatprep.mubr.bf16.mxu0 0
  %502 = vmatmul.mubr.bf16.gmra.mrb[0].mxu0 %v278
  %v503 = vpop.f32.mrb[0].mxu0
  %v504 = vadd.f32 %v439, %v503
  %v505 = vpop.f32.mrb[0].mxu0
  %v506 = vpop.f32.mrb[0].mxu0
  %v507 = vpop.f32.mrb[0].mxu0
  %508 = vdwg.mxu0
  %s509 = scalar_lea.vmem %s7, 80
  %510 = vst.msk [vmem:[%s509] sm:$0xff] %vm270, %v488
  %511 = vst.msk [vmem:[%s509 + $0x8] sm:$0xff] %vm270, %v491
  %512 = vst.msk [vmem:[%s509 + $0x10] sm:$0xff] %vm270, %v496
  %513 = vst.msk [vmem:[%s509 + $0x18] sm:$0xff] %vm270, %v499
  %514 = vst.msk [vmem:[%s509 + $0x20] sm:$0xff] %vm270, %v504
  // Predicated region
  $region30: #{rnn_icm_agent_forward.2} parent=0 // pred_check
    _
  $region31: #{rnn_icm_agent_forward.2} parent=0 // pred_check_branch
    %516 = sbr.rel (0) target = $region33
  $region32: #{rnn_icm_agent_forward.2} parent=0 // pred_region
    _
  $region33: #{rnn_icm_agent_forward.2} parent=0 // pred_fallthru
    _
  // Predicated region
  $region34: #{rnn_icm_agent_forward.2} parent=0 // pred_check
    _
  $region35: #{rnn_icm_agent_forward.2} parent=0 // pred_check_branch
    %518 = sbr.rel (0) target = $region37
  $region36: #{rnn_icm_agent_forward.2} parent=0 // pred_region
    _
  $region37: #{rnn_icm_agent_forward.2} parent=0 // pred_fallthru
    _

// kernel: rnn_icm_agent_forward.3
$region0: #{rnn_icm_agent_forward.3}
  #allocation0 [shape = 'u32[]', space=smem, size = 0x4, offset = 0x4, fixed_abs, tag = 'smem constant byte address 0x4 - core index']
  #allocation1 [shape = 'u32[144,128]{1,0:T(1,128)}', space=vmem, size = 0x12000, scoped, tag = 'internal scratch']
  #allocation2 [shape = 'f32[8,32]{1,0:T(8,128)}', space=vmem, size = 0x1000, scoped, tag = 'scratch operand']
  %s0 = inlined_call_operand.vmem [shape: f32[3,5,8,32], index: 0, kind: input, shape index: {}]
  %s1 = inlined_call_operand.vmem [shape: f32[8,32], index: 1, kind: input, shape index: {}]
  %s2 = inlined_call_operand.vmem [shape: bf16[3,32,32], index: 2, kind: input, shape index: {}]
  %s3 = inlined_call_operand.vmem [shape: f32[1,32], index: 3, kind: input, shape index: {}]
  %s4 = inlined_call_operand.vmem [shape: bf16[32,6], index: 4, kind: input, shape index: {}]
  %s5 = inlined_call_operand.vmem [shape: f32[1,6], index: 5, kind: input, shape index: {}]
  %s6 = inlined_call_operand.vmem [shape: f32[5,8,32], index: 6, kind: output, shape index: {0}]
  %s7 = inlined_call_operand.vmem [shape: f32[5,8,6], index: 7, kind: output, shape index: {1}]
  %8 = xla_tuple %s6, %s7
  %s9 = sld [smem:[#allocation0]]
  $region46: #{rnn_icm_agent_forward.3} parent=0
    _
  %s11 = ssub.s32 1, %s9
  %s12 = scalar_select 0, %s11, %s9
  // Predicated region
  $region2: #{rnn_icm_agent_forward.3} parent=0 // pred_check
    _
  $region3: #{rnn_icm_agent_forward.3} parent=0 // pred_check_branch
    %14 = sbr.rel (0) target = $region5
  $region4: #{rnn_icm_agent_forward.3} parent=0 // pred_region
    _
  $region5: #{rnn_icm_agent_forward.3} parent=0 // pred_fallthru
    _
  // Predicated region
  $region6: #{rnn_icm_agent_forward.3} parent=0 // pred_check
    _
  $region7: #{rnn_icm_agent_forward.3} parent=0 // pred_check_branch
    %16 = sbr.rel (0) target = $region9
  $region8: #{rnn_icm_agent_forward.3} parent=0 // pred_region
    _
  $region9: #{rnn_icm_agent_forward.3} parent=0 // pred_fallthru
    _
  // Predicated region
  $region10: #{rnn_icm_agent_forward.3} parent=0 // pred_check
    _
  $region11: #{rnn_icm_agent_forward.3} parent=0 // pred_check_branch
    %18 = sbr.rel (0) target = $region13
  $region12: #{rnn_icm_agent_forward.3} parent=0 // pred_region
    _
  $region13: #{rnn_icm_agent_forward.3} parent=0 // pred_fallthru
    _
  // Predicated region
  $region14: #{rnn_icm_agent_forward.3} parent=0 // pred_check
    _
  $region15: #{rnn_icm_agent_forward.3} parent=0 // pred_check_branch
    %20 = sbr.rel (0) target = $region17
  $region16: #{rnn_icm_agent_forward.3} parent=0 // pred_region
    _
  $region17: #{rnn_icm_agent_forward.3} parent=0 // pred_fallthru
    _
  // Predicated region
  $region18: #{rnn_icm_agent_forward.3} parent=0 // pred_check
    _
  $region19: #{rnn_icm_agent_forward.3} parent=0 // pred_check_branch
    %22 = sbr.rel (0) target = $region21
  $region20: #{rnn_icm_agent_forward.3} parent=0 // pred_region
    _
  $region21: #{rnn_icm_agent_forward.3} parent=0 // pred_fallthru
    _
  // Predicated region
  $region22: #{rnn_icm_agent_forward.3} parent=0 // pred_check
    _
  $region23: #{rnn_icm_agent_forward.3} parent=0 // pred_check_branch
    %24 = sbr.rel (0) target = $region25
  $region24: #{rnn_icm_agent_forward.3} parent=0 // pred_region
    _
  $region25: #{rnn_icm_agent_forward.3} parent=0 // pred_fallthru
    _
  %p26 = scmp.eq.s32.totalorder 0, 0
  // Predicated region
  $region26: #{rnn_icm_agent_forward.3} parent=0 // pred_check
    %p27 = pneg %p26
  $region27: #{rnn_icm_agent_forward.3} parent=0 // pred_check_branch
    %29 = sbr.rel (%p27) target = $region29
  $region28: #{rnn_icm_agent_forward.3} parent=0 // pred_region
    %v30 = vld [vmem:[%s1] sm:$0xff]
    %vm31 = vcmask 261120
    %32 = vst.msk [vmem:[#allocation2] sm:$0xff] %vm31, %v30
  $region29: #{rnn_icm_agent_forward.3} parent=0 // pred_fallthru
    _
  %v33 = vld [vmem:[#allocation2] sm:$0xff]
  %v34 = vpack.c.bf16 %v33, %v33
  %v35 = vld [vmem:[%s2] sm:$0xf]
  %v36 = vld [vmem:[%s2 + $0x4] sm:$0xf]
  %v37 = vld [vmem:[%s2 + $0x8] sm:$0xf]
  %v38 = vld [vmem:[%s2 + $0xc] sm:$0xf]
  %v43 = vunpack.c.l.b16 %v35
  %v44 = vunpack.c.l.b16 %v36
  %v45 = vunpack.c.l.b16 %v37
  %v46 = vunpack.c.l.b16 %v38
  %v47 = vpack.c.b16 %v44, %v43
  %v48 = vpack.c.b16 %v46, %v45
  %vm51 = vcmask 261120
  %v53 = vsel %vm51, %v34, 0
  %55 = vmatprep.subr.bf16.mxu0 0
  %56 = vmatpush1.bf16.msra.mxu0 %v47
  %57 = vmatprep.subr.bf16.mxu0 0
  %58 = vmatpush1.bf16.msra.mxu0 %v48
  %59 = vmatprep.subr.bf16.mxu0 0
  %60 = vmatpush1.bf16.msra.mxu0 0
  %61 = vmatprep.subr.bf16.mxu0 0
  %62 = vmatpush1.bf16.msra.mxu0 0
  %63 = vmatprep.subr.bf16.mxu0 0
  %64 = vmatpush1.bf16.msra.mxu0 0
  %65 = vmatprep.subr.bf16.mxu0 0
  %66 = vmatpush1.bf16.msra.mxu0 0
  %67 = vmatprep.subr.bf16.mxu0 0
  %68 = vmatpush1.bf16.msra.mxu0 0
  %69 = vmatprep.subr.bf16.mxu0 0
  %70 = vmatpush1.bf16.msra.mxu0 0
  %71 = vmatprep.subr.bf16.mxu0 0
  %72 = vmatpush1.bf16.msra.mxu0 0
  %73 = vmatprep.subr.bf16.mxu0 0
  %74 = vmatpush1.bf16.msra.mxu0 0
  %75 = vmatprep.subr.bf16.mxu0 0
  %76 = vmatpush1.bf16.msra.mxu0 0
  %77 = vmatprep.subr.bf16.mxu0 0
  %78 = vmatpush1.bf16.msra.mxu0 0
  %79 = vmatprep.subr.bf16.mxu0 0
  %80 = vmatpush1.bf16.msra.mxu0 0
  %81 = vmatprep.subr.bf16.mxu0 0
  %82 = vmatpush1.bf16.msra.mxu0 0
  %83 = vmatprep.subr.bf16.mxu0 0
  %84 = vmatpush1.bf16.msra.mxu0 0
  %85 = vmatprep.subr.bf16.mxu0 0
  %86 = vmatpush1.bf16.msra.mxu0 0
  %87 = vmatprep.mubr.bf16.mxu0 0
  %88 = vmatmul.mubr.bf16.gmra.mrb[0].mxu0 %v53
  %v89 = vpop.f32.mrb[0].mxu0
  %v90 = vadd.f32 0.0, %v89
  %v91 = vpop.f32.mrb[0].mxu0
  %v92 = vpop.f32.mrb[0].mxu0
  %v93 = vpop.f32.mrb[0].mxu0
  %94 = vdwg.mxu0
  %s95 = scalar_lea.vmem %s2, 16
  %v96 = vld [vmem:[%s95] sm:$0xf]
  %v97 = vld [vmem:[%s95 + $0x4] sm:$0xf]
  %v98 = vld [vmem:[%s95 + $0x8] sm:$0xf]
  %v99 = vld [vmem:[%s95 + $0xc] sm:$0xf]
  %v104 = vunpack.c.l.b16 %v96
  %v105 = vunpack.c.l.b16 %v97
  %v106 = vunpack.c.l.b16 %v98
  %v107 = vunpack.c.l.b16 %v99
  %v108 = vpack.c.b16 %v105, %v104
  %v109 = vpack.c.b16 %v107, %v106
  %112 = vmatprep.subr.bf16.mxu0 0
  %113 = vmatpush1.bf16.msra.mxu0 %v108
  %114 = vmatprep.subr.bf16.mxu0 0
  %115 = vmatpush1.bf16.msra.mxu0 %v109
  %116 = vmatprep.subr.bf16.mxu0 0
  %117 = vmatpush1.bf16.msra.mxu0 0
  %118 = vmatprep.subr.bf16.mxu0 0
  %119 = vmatpush1.bf16.msra.mxu0 0
  %120 = vmatprep.subr.bf16.mxu0 0
  %121 = vmatpush1.bf16.msra.mxu0 0
  %122 = vmatprep.subr.bf16.mxu0 0
  %123 = vmatpush1.bf16.msra.mxu0 0
  %124 = vmatprep.subr.bf16.mxu0 0
  %125 = vmatpush1.bf16.msra.mxu0 0
  %126 = vmatprep.subr.bf16.mxu0 0
  %127 = vmatpush1.bf16.msra.mxu0 0
  %128 = vmatprep.subr.bf16.mxu0 0
  %129 = vmatpush1.bf16.msra.mxu0 0
  %130 = vmatprep.subr.bf16.mxu0 0
  %131 = vmatpush1.bf16.msra.mxu0 0
  %132 = vmatprep.subr.bf16.mxu0 0
  %133 = vmatpush1.bf16.msra.mxu0 0
  %134 = vmatprep.subr.bf16.mxu0 0
  %135 = vmatpush1.bf16.msra.mxu0 0
  %136 = vmatprep.subr.bf16.mxu0 0
  %137 = vmatpush1.bf16.msra.mxu0 0
  %138 = vmatprep.subr.bf16.mxu0 0
  %139 = vmatpush1.bf16.msra.mxu0 0
  %140 = vmatprep.subr.bf16.mxu0 0
  %141 = vmatpush1.bf16.msra.mxu0 0
  %142 = vmatprep.subr.bf16.mxu0 0
  %143 = vmatpush1.bf16.msra.mxu0 0
  %144 = vmatprep.mubr.bf16.mxu0 0
  %145 = vmatmul.mubr.bf16.gmra.mrb[0].mxu0 %v53
  %v146 = vpop.f32.mrb[0].mxu0
  %v147 = vadd.f32 0.0, %v146
  %v148 = vpop.f32.mrb[0].mxu0
  %v149 = vpop.f32.mrb[0].mxu0
  %v150 = vpop.f32.mrb[0].mxu0
  %151 = vdwg.mxu0
  %s152 = scalar_lea.vmem %s2, 32
  %v153 = vld [vmem:[%s152] sm:$0xf]
  %v154 = vld [vmem:[%s152 + $0x4] sm:$0xf]
  %v155 = vld [vmem:[%s152 + $0x8] sm:$0xf]
  %v156 = vld [vmem:[%s152 + $0xc] sm:$0xf]
  %v157 = vld [vmem:[%s3] sm:$0x1]
  %v159 = vlaneseq
  %v160 = vshrl.u32 %v159, 7
  %v161 = vsub.s32 0, %v160
  %v162 = vrot.slane %v157, %v161
  %v168 = vunpack.c.l.b16 %v153
  %v169 = vunpack.c.l.b16 %v154
  %v170 = vunpack.c.l.b16 %v155
  %v171 = vunpack.c.l.b16 %v156
  %v172 = vpack.c.b16 %v169, %v168
  %v173 = vpack.c.b16 %v171, %v170
  %176 = vmatprep.subr.bf16.mxu0 0
  %177 = vmatpush1.bf16.msra.mxu0 %v172
  %178 = vmatprep.subr.bf16.mxu0 0
  %179 = vmatpush1.bf16.msra.mxu0 %v173
  %180 = vmatprep.subr.bf16.mxu0 0
  %181 = vmatpush1.bf16.msra.mxu0 0
  %182 = vmatprep.subr.bf16.mxu0 0
  %183 = vmatpush1.bf16.msra.mxu0 0
  %184 = vmatprep.subr.bf16.mxu0 0
  %185 = vmatpush1.bf16.msra.mxu0 0
  %186 = vmatprep.subr.bf16.mxu0 0
  %187 = vmatpush1.bf16.msra.mxu0 0
  %188 = vmatprep.subr.bf16.mxu0 0
  %189 = vmatpush1.bf16.msra.mxu0 0
  %190 = vmatprep.subr.bf16.mxu0 0
  %191 = vmatpush1.bf16.msra.mxu0 0
  %192 = vmatprep.subr.bf16.mxu0 0
  %193 = vmatpush1.bf16.msra.mxu0 0
  %194 = vmatprep.subr.bf16.mxu0 0
  %195 = vmatpush1.bf16.msra.mxu0 0
  %196 = vmatprep.subr.bf16.mxu0 0
  %197 = vmatpush1.bf16.msra.mxu0 0
  %198 = vmatprep.subr.bf16.mxu0 0
  %199 = vmatpush1.bf16.msra.mxu0 0
  %200 = vmatprep.subr.bf16.mxu0 0
  %201 = vmatpush1.bf16.msra.mxu0 0
  %202 = vmatprep.subr.bf16.mxu0 0
  %203 = vmatpush1.bf16.msra.mxu0 0
  %204 = vmatprep.subr.bf16.mxu0 0
  %205 = vmatpush1.bf16.msra.mxu0 0
  %206 = vmatprep.subr.bf16.mxu0 0
  %207 = vmatpush1.bf16.msra.mxu0 0
  %208 = vmatprep.mubr.bf16.mxu0 0
  %209 = vmatmul.mubr.bf16.gmra.mrb[0].mxu0 %v53
  %v210 = vpop.f32.mrb[0].mxu0
  %v211 = vadd.f32 %v162, %v210
  %v212 = vpop.f32.mrb[0].mxu0
  %v213 = vpop.f32.mrb[0].mxu0
  %v214 = vpop.f32.mrb[0].mxu0
  %215 = vdwg.mxu0
  %v216 = vld [vmem:[%s0] sm:$0xff]
  %v217 = vadd.f32 %v216, %v90
  %v218 = vxor.u32 %v217, 2147483648
  %v219 = vmul.f32 %v218, 1.442695
  %v220 = vpow.pop %v219
  %v221 = vadd.f32 %v220, 1.0
  %v222 = vrcp.pop %v221
  %v223 = vmul.f32 1.0, %v222
  %s224 = scalar_lea.vmem %s0, 40
  %v225 = vld [vmem:[%s224] sm:$0xff]
  %v226 = vadd.f32 %v225, %v147
  %v227 = vxor.u32 %v226, 2147483648
  %v228 = vmul.f32 %v227, 1.442695
  %v229 = vpow.pop %v228
  %v230 = vadd.f32 %v229, 1.0
  %v231 = vrcp.pop %v230
  %v232 = vmul.f32 1.0, %v231
  %s233 = scalar_lea.vmem %s0, 80
  %v234 = vld [vmem:[%s233] sm:$0xff]
  %v235 = vmul.f32 %v223, %v211
  %v236 = vadd.f32 %v234, %v235
  %v237 = vtanh.pop %v236
  %v238 = vsub.f32 1.0, %v232
  %v239 = vmul.f32 %v238, %v237
  %v240 = vmul.f32 %v232, %v33
  %v241 = vadd.f32 %v239, %v240
  %242 = vst.msk [vmem:[%s6] sm:$0xff] %vm51, %v241
  %v243 = vpack.c.bf16 %v241, %v241
  %v244 = vld [vmem:[%s4] sm:$0xf]
  %v245 = vld [vmem:[%s4 + $0x4] sm:$0xf]
  %v246 = vld [vmem:[%s4 + $0x8] sm:$0xf]
  %v247 = vld [vmem:[%s4 + $0xc] sm:$0xf]
  %v248 = vld [vmem:[%s5] sm:$0x1]
  %v250 = vlaneseq
  %v251 = vshrl.u32 %v250, 7
  %v252 = vsub.s32 0, %v251
  %v253 = vrot.slane %v248, %v252
  %v259 = vunpack.c.l.b16 %v244
  %v260 = vunpack.c.l.b16 %v245
  %v261 = vunpack.c.l.b16 %v246
  %v262 = vunpack.c.l.b16 %v247
  %v263 = vpack.c.b16 %v260, %v259
  %v264 = vpack.c.b16 %v262, %v261
  %v268 = vsel %vm51, %v243, 0
  %270 = vmatprep.subr.bf16.mxu0 0
  %271 = vmatpush1.bf16.msra.mxu0 %v263
  %272 = vmatprep.subr.bf16.mxu0 0
  %273 = vmatpush1.bf16.msra.mxu0 %v264
  %274 = vmatprep.subr.bf16.mxu0 0
  %275 = vmatpush1.bf16.msra.mxu0 0
  %276 = vmatprep.subr.bf16.mxu0 0
  %277 = vmatpush1.bf16.msra.mxu0 0
  %278 = vmatprep.subr.bf16.mxu0 0
  %279 = vmatpush1.bf16.msra.mxu0 0
  %280 = vmatprep.subr.bf16.mxu0 0
  %281 = vmatpush1.bf16.msra.mxu0 0
  %282 = vmatprep.subr.bf16.mxu0 0
  %283 = vmatpush1.bf16.msra.mxu0 0
  %284 = vmatprep.subr.bf16.mxu0 0
  %285 = vmatpush1.bf16.msra.mxu0 0
  %286 = vmatprep.subr.bf16.mxu0 0
  %287 = vmatpush1.bf16.msra.mxu0 0
  %288 = vmatprep.subr.bf16.mxu0 0
  %289 = vmatpush1.bf16.msra.mxu0 0
  %290 = vmatprep.subr.bf16.mxu0 0
  %291 = vmatpush1.bf16.msra.mxu0 0
  %292 = vmatprep.subr.bf16.mxu0 0
  %293 = vmatpush1.bf16.msra.mxu0 0
  %294 = vmatprep.subr.bf16.mxu0 0
  %295 = vmatpush1.bf16.msra.mxu0 0
  %296 = vmatprep.subr.bf16.mxu0 0
  %297 = vmatpush1.bf16.msra.mxu0 0
  %298 = vmatprep.subr.bf16.mxu0 0
  %299 = vmatpush1.bf16.msra.mxu0 0
  %300 = vmatprep.subr.bf16.mxu0 0
  %301 = vmatpush1.bf16.msra.mxu0 0
  %302 = vmatprep.mubr.bf16.mxu0 0
  %303 = vmatmul.mubr.bf16.gmra.mrb[0].mxu0 %v268
  %v304 = vpop.f32.mrb[0].mxu0
  %v305 = vadd.f32 %v253, %v304
  %v306 = vpop.f32.mrb[0].mxu0
  %v307 = vpop.f32.mrb[0].mxu0
  %v308 = vpop.f32.mrb[0].mxu0
  %309 = vdwg.mxu0
  %vm310 = vcmask 48128
  %311 = vst.msk [vmem:[%s7] sm:$0xff] %vm310, %v305
  %v312 = vld [vmem:[%s2] sm:$0xf]
  %v313 = vld [vmem:[%s2 + $0x4] sm:$0xf]
  %v314 = vld [vmem:[%s2 + $0x8] sm:$0xf]
  %v315 = vld [vmem:[%s2 + $0xc] sm:$0xf]
  %v320 = vunpack.c.l.b16 %v312
  %v321 = vunpack.c.l.b16 %v313
  %v322 = vunpack.c.l.b16 %v314
  %v323 = vunpack.c.l.b16 %v315
  %v324 = vpack.c.b16 %v321, %v320
  %v325 = vpack.c.b16 %v323, %v322
  %328 = vmatprep.subr.bf16.mxu0 0
  %329 = vmatpush1.bf16.msra.mxu0 %v324
  %330 = vmatprep.subr.bf16.mxu0 0
  %331 = vmatpush1.bf16.msra.mxu0 %v325
  %332 = vmatprep.subr.bf16.mxu0 0
  %333 = vmatpush1.bf16.msra.mxu0 0
  %334 = vmatprep.subr.bf16.mxu0 0
  %335 = vmatpush1.bf16.msra.mxu0 0
  %336 = vmatprep.subr.bf16.mxu0 0
  %337 = vmatpush1.bf16.msra.mxu0 0
  %338 = vmatprep.subr.bf16.mxu0 0
  %339 = vmatpush1.bf16.msra.mxu0 0
  %340 = vmatprep.subr.bf16.mxu0 0
  %341 = vmatpush1.bf16.msra.mxu0 0
  %342 = vmatprep.subr.bf16.mxu0 0
  %343 = vmatpush1.bf16.msra.mxu0 0
  %344 = vmatprep.subr.bf16.mxu0 0
  %345 = vmatpush1.bf16.msra.mxu0 0
  %346 = vmatprep.subr.bf16.mxu0 0
  %347 = vmatpush1.bf16.msra.mxu0 0
  %348 = vmatprep.subr.bf16.mxu0 0
  %349 = vmatpush1.bf16.msra.mxu0 0
  %350 = vmatprep.subr.bf16.mxu0 0
  %351 = vmatpush1.bf16.msra.mxu0 0
  %352 = vmatprep.subr.bf16.mxu0 0
  %353 = vmatpush1.bf16.msra.mxu0 0
  %354 = vmatprep.subr.bf16.mxu0 0
  %355 = vmatpush1.bf16.msra.mxu0 0
  %356 = vmatprep.subr.bf16.mxu0 0
  %357 = vmatpush1.bf16.msra.mxu0 0
  %358 = vmatprep.subr.bf16.mxu0 0
  %359 = vmatpush1.bf16.msra.mxu0 0
  %360 = vmatprep.mubr.bf16.mxu0 0
  %361 = vmatmul.mubr.bf16.gmra.mrb[0].mxu0 %v268
  %v362 = vpop.f32.mrb[0].mxu0
  %v363 = vadd.f32 0.0, %v362
  %v364 = vpop.f32.mrb[0].mxu0
  %v365 = vpop.f32.mrb[0].mxu0
  %v366 = vpop.f32.mrb[0].mxu0
  %367 = vdwg.mxu0
  %v368 = vld [vmem:[%s95] sm:$0xf]
  %v369 = vld [vmem:[%s95 + $0x4] sm:$0xf]
  %v370 = vld [vmem:[%s95 + $0x8] sm:$0xf]
  %v371 = vld [vmem:[%s95 + $0xc] sm:$0xf]
  %v376 = vunpack.c.l.b16 %v368
  %v377 = vunpack.c.l.b16 %v369
  %v378 = vunpack.c.l.b16 %v370
  %v379 = vunpack.c.l.b16 %v371
  %v380 = vpack.c.b16 %v377, %v376
  %v381 = vpack.c.b16 %v379, %v378
  %384 = vmatprep.subr.bf16.mxu0 0
  %385 = vmatpush1.bf16.msra.mxu0 %v380
  %386 = vmatprep.subr.bf16.mxu0 0
  %387 = vmatpush1.bf16.msra.mxu0 %v381
  %388 = vmatprep.subr.bf16.mxu0 0
  %389 = vmatpush1.bf16.msra.mxu0 0
  %390 = vmatprep.subr.bf16.mxu0 0
  %391 = vmatpush1.bf16.msra.mxu0 0
  %392 = vmatprep.subr.bf16.mxu0 0
  %393 = vmatpush1.bf16.msra.mxu0 0
  %394 = vmatprep.subr.bf16.mxu0 0
  %395 = vmatpush1.bf16.msra.mxu0 0
  %396 = vmatprep.subr.bf16.mxu0 0
  %397 = vmatpush1.bf16.msra.mxu0 0
  %398 = vmatprep.subr.bf16.mxu0 0
  %399 = vmatpush1.bf16.msra.mxu0 0
  %400 = vmatprep.subr.bf16.mxu0 0
  %401 = vmatpush1.bf16.msra.mxu0 0
  %402 = vmatprep.subr.bf16.mxu0 0
  %403 = vmatpush1.bf16.msra.mxu0 0
  %404 = vmatprep.subr.bf16.mxu0 0
  %405 = vmatpush1.bf16.msra.mxu0 0
  %406 = vmatprep.subr.bf16.mxu0 0
  %407 = vmatpush1.bf16.msra.mxu0 0
  %408 = vmatprep.subr.bf16.mxu0 0
  %409 = vmatpush1.bf16.msra.mxu0 0
  %410 = vmatprep.subr.bf16.mxu0 0
  %411 = vmatpush1.bf16.msra.mxu0 0
  %412 = vmatprep.subr.bf16.mxu0 0
  %413 = vmatpush1.bf16.msra.mxu0 0
  %414 = vmatprep.subr.bf16.mxu0 0
  %415 = vmatpush1.bf16.msra.mxu0 0
  %416 = vmatprep.mubr.bf16.mxu0 0
  %417 = vmatmul.mubr.bf16.gmra.mrb[0].mxu0 %v268
  %v418 = vpop.f32.mrb[0].mxu0
  %v419 = vadd.f32 0.0, %v418
  %v420 = vpop.f32.mrb[0].mxu0
  %v421 = vpop.f32.mrb[0].mxu0
  %v422 = vpop.f32.mrb[0].mxu0
  %423 = vdwg.mxu0
  %v424 = vld [vmem:[%s152] sm:$0xf]
  %v425 = vld [vmem:[%s152 + $0x4] sm:$0xf]
  %v426 = vld [vmem:[%s152 + $0x8] sm:$0xf]
  %v427 = vld [vmem:[%s152 + $0xc] sm:$0xf]
  %v428 = vld [vmem:[%s3] sm:$0x1]
  %v430 = vlaneseq
  %v431 = vshrl.u32 %v430, 7
  %v432 = vsub.s32 0, %v431
  %v433 = vrot.slane %v428, %v432
  %v439 = vunpack.c.l.b16 %v424
  %v440 = vunpack.c.l.b16 %v425
  %v441 = vunpack.c.l.b16 %v426
  %v442 = vunpack.c.l.b16 %v427
  %v443 = vpack.c.b16 %v440, %v439
  %v444 = vpack.c.b16 %v442, %v441
  %447 = vmatprep.subr.bf16.mxu0 0
  %448 = vmatpush1.bf16.msra.mxu0 %v443
  %449 = vmatprep.subr.bf16.mxu0 0
  %450 = vmatpush1.bf16.msra.mxu0 %v444
  %451 = vmatprep.subr.bf16.mxu0 0
  %452 = vmatpush1.bf16.msra.mxu0 0
  %453 = vmatprep.subr.bf16.mxu0 0
  %454 = vmatpush1.bf16.msra.mxu0 0
  %455 = vmatprep.subr.bf16.mxu0 0
  %456 = vmatpush1.bf16.msra.mxu0 0
  %457 = vmatprep.subr.bf16.mxu0 0
  %458 = vmatpush1.bf16.msra.mxu0 0
  %459 = vmatprep.subr.bf16.mxu0 0
  %460 = vmatpush1.bf16.msra.mxu0 0
  %461 = vmatprep.subr.bf16.mxu0 0
  %462 = vmatpush1.bf16.msra.mxu0 0
  %463 = vmatprep.subr.bf16.mxu0 0
  %464 = vmatpush1.bf16.msra.mxu0 0
  %465 = vmatprep.subr.bf16.mxu0 0
  %466 = vmatpush1.bf16.msra.mxu0 0
  %467 = vmatprep.subr.bf16.mxu0 0
  %468 = vmatpush1.bf16.msra.mxu0 0
  %469 = vmatprep.subr.bf16.mxu0 0
  %470 = vmatpush1.bf16.msra.mxu0 0
  %471 = vmatprep.subr.bf16.mxu0 0
  %472 = vmatpush1.bf16.msra.mxu0 0
  %473 = vmatprep.subr.bf16.mxu0 0
  %474 = vmatpush1.bf16.msra.mxu0 0
  %475 = vmatprep.subr.bf16.mxu0 0
  %476 = vmatpush1.bf16.msra.mxu0 0
  %477 = vmatprep.subr.bf16.mxu0 0
  %478 = vmatpush1.bf16.msra.mxu0 0
  %479 = vmatprep.mubr.bf16.mxu0 0
  %480 = vmatmul.mubr.bf16.gmra.mrb[0].mxu0 %v268
  %v481 = vpop.f32.mrb[0].mxu0
  %v482 = vadd.f32 %v433, %v481
  %v483 = vpop.f32.mrb[0].mxu0
  %v484 = vpop.f32.mrb[0].mxu0
  %v485 = vpop.f32.mrb[0].mxu0
  %486 = vdwg.mxu0
  %s487 = scalar_lea.vmem %s0, 8
  %v488 = vld [vmem:[%s487] sm:$0xff]
  %v489 = vadd.f32 %v488, %v363
  %v490 = vxor.u32 %v489, 2147483648
  %v491 = vmul.f32 %v490, 1.442695
  %v492 = vpow.pop %v491
  %v493 = vadd.f32 %v492, 1.0
  %v494 = vrcp.pop %v493
  %v495 = vmul.f32 1.0, %v494
  %s496 = scalar_lea.vmem %s0, 48
  %v497 = vld [vmem:[%s496] sm:$0xff]
  %v498 = vadd.f32 %v497, %v419
  %v499 = vxor.u32 %v498, 2147483648
  %v500 = vmul.f32 %v499, 1.442695
  %v501 = vpow.pop %v500
  %v502 = vadd.f32 %v501, 1.0
  %v503 = vrcp.pop %v502
  %v504 = vmul.f32 1.0, %v503
  %s505 = scalar_lea.vmem %s0, 88
  %v506 = vld [vmem:[%s505] sm:$0xff]
  %v507 = vmul.f32 %v495, %v482
  %v508 = vadd.f32 %v506, %v507
  %v509 = vtanh.pop %v508
  %v510 = vsub.f32 1.0, %v504
  %v511 = vmul.f32 %v510, %v509
  %v512 = vmul.f32 %v504, %v241
  %v513 = vadd.f32 %v511, %v512
  %s514 = scalar_lea.vmem %s6, 8
  %515 = vst.msk [vmem:[%s514] sm:$0xff] %vm51, %v513
  %v516 = vpack.c.bf16 %v513, %v513
  %v517 = vld [vmem:[%s4] sm:$0xf]
  %v518 = vld [vmem:[%s4 + $0x4] sm:$0xf]
  %v519 = vld [vmem:[%s4 + $0x8] sm:$0xf]
  %v520 = vld [vmem:[%s4 + $0xc] sm:$0xf]
  %v521 = vld [vmem:[%s5] sm:$0x1]
  %v523 = vlaneseq
  %v524 = vshrl.u32 %v523, 7
  %v525 = vsub.s32 0, %v524
  %v526 = vrot.slane %v521, %v525
  %v532 = vunpack.c.l.b16 %v517
  %v533 = vunpack.c.l.b16 %v518
  %v534 = vunpack.c.l.b16 %v519
  %v535 = vunpack.c.l.b16 %v520
  %v536 = vpack.c.b16 %v533, %v532
  %v537 = vpack.c.b16 %v535, %v534
  %v541 = vsel %vm51, %v516, 0
  %543 = vmatprep.subr.bf16.mxu0 0
  %544 = vmatpush1.bf16.msra.mxu0 %v536
  %545 = vmatprep.subr.bf16.mxu0 0
  %546 = vmatpush1.bf16.msra.mxu0 %v537
  %547 = vmatprep.subr.bf16.mxu0 0
  %548 = vmatpush1.bf16.msra.mxu0 0
  %549 = vmatprep.subr.bf16.mxu0 0
  %550 = vmatpush1.bf16.msra.mxu0 0
  %551 = vmatprep.subr.bf16.mxu0 0
  %552 = vmatpush1.bf16.msra.mxu0 0
  %553 = vmatprep.subr.bf16.mxu0 0
  %554 = vmatpush1.bf16.msra.mxu0 0
  %555 = vmatprep.subr.bf16.mxu0 0
  %556 = vmatpush1.bf16.msra.mxu0 0
  %557 = vmatprep.subr.bf16.mxu0 0
  %558 = vmatpush1.bf16.msra.mxu0 0
  %559 = vmatprep.subr.bf16.mxu0 0
  %560 = vmatpush1.bf16.msra.mxu0 0
  %561 = vmatprep.subr.bf16.mxu0 0
  %562 = vmatpush1.bf16.msra.mxu0 0
  %563 = vmatprep.subr.bf16.mxu0 0
  %564 = vmatpush1.bf16.msra.mxu0 0
  %565 = vmatprep.subr.bf16.mxu0 0
  %566 = vmatpush1.bf16.msra.mxu0 0
  %567 = vmatprep.subr.bf16.mxu0 0
  %568 = vmatpush1.bf16.msra.mxu0 0
  %569 = vmatprep.subr.bf16.mxu0 0
  %570 = vmatpush1.bf16.msra.mxu0 0
  %571 = vmatprep.subr.bf16.mxu0 0
  %572 = vmatpush1.bf16.msra.mxu0 0
  %573 = vmatprep.subr.bf16.mxu0 0
  %574 = vmatpush1.bf16.msra.mxu0 0
  %575 = vmatprep.mubr.bf16.mxu0 0
  %576 = vmatmul.mubr.bf16.gmra.mrb[0].mxu0 %v541
  %v577 = vpop.f32.mrb[0].mxu0
  %v578 = vadd.f32 %v526, %v577
  %v579 = vpop.f32.mrb[0].mxu0
  %v580 = vpop.f32.mrb[0].mxu0
  %v581 = vpop.f32.mrb[0].mxu0
  %582 = vdwg.mxu0
  %s583 = scalar_lea.vmem %s7, 8
  %584 = vst.msk [vmem:[%s583] sm:$0xff] %vm310, %v578
  %v585 = vld [vmem:[%s2] sm:$0xf]
  %v586 = vld [vmem:[%s2 + $0x4] sm:$0xf]
  %v587 = vld [vmem:[%s2 + $0x8] sm:$0xf]
  %v588 = vld [vmem:[%s2 + $0xc] sm:$0xf]
  %v593 = vunpack.c.l.b16 %v585
  %v594 = vunpack.c.l.b16 %v586
  %v595 = vunpack.c.l.b16 %v587
  %v596 = vunpack.c.l.b16 %v588
  %v597 = vpack.c.b16 %v594, %v593
  %v598 = vpack.c.b16 %v596, %v595
  %601 = vmatprep.subr.bf16.mxu0 0
  %602 = vmatpush1.bf16.msra.mxu0 %v597
  %603 = vmatprep.subr.bf16.mxu0 0
  %604 = vmatpush1.bf16.msra.mxu0 %v598
  %605 = vmatprep.subr.bf16.mxu0 0
  %606 = vmatpush1.bf16.msra.mxu0 0
  %607 = vmatprep.subr.bf16.mxu0 0
  %608 = vmatpush1.bf16.msra.mxu0 0
  %609 = vmatprep.subr.bf16.mxu0 0
  %610 = vmatpush1.bf16.msra.mxu0 0
  %611 = vmatprep.subr.bf16.mxu0 0
  %612 = vmatpush1.bf16.msra.mxu0 0
  %613 = vmatprep.subr.bf16.mxu0 0
  %614 = vmatpush1.bf16.msra.mxu0 0
  %615 = vmatprep.subr.bf16.mxu0 0
  %616 = vmatpush1.bf16.msra.mxu0 0
  %617 = vmatprep.subr.bf16.mxu0 0
  %618 = vmatpush1.bf16.msra.mxu0 0
  %619 = vmatprep.subr.bf16.mxu0 0
  %620 = vmatpush1.bf16.msra.mxu0 0
  %621 = vmatprep.subr.bf16.mxu0 0
  %622 = vmatpush1.bf16.msra.mxu0 0
  %623 = vmatprep.subr.bf16.mxu0 0
  %624 = vmatpush1.bf16.msra.mxu0 0
  %625 = vmatprep.subr.bf16.mxu0 0
  %626 = vmatpush1.bf16.msra.mxu0 0
  %627 = vmatprep.subr.bf16.mxu0 0
  %628 = vmatpush1.bf16.msra.mxu0 0
  %629 = vmatprep.subr.bf16.mxu0 0
  %630 = vmatpush1.bf16.msra.mxu0 0
  %631 = vmatprep.subr.bf16.mxu0 0
  %632 = vmatpush1.bf16.msra.mxu0 0
  %633 = vmatprep.mubr.bf16.mxu0 0
  %634 = vmatmul.mubr.bf16.gmra.mrb[0].mxu0 %v541
  %v635 = vpop.f32.mrb[0].mxu0
  %v636 = vadd.f32 0.0, %v635
  %v637 = vpop.f32.mrb[0].mxu0
  %v638 = vpop.f32.mrb[0].mxu0
  %v639 = vpop.f32.mrb[0].mxu0
  %640 = vdwg.mxu0
  %v641 = vld [vmem:[%s95] sm:$0xf]
  %v642 = vld [vmem:[%s95 + $0x4] sm:$0xf]
  %v643 = vld [vmem:[%s95 + $0x8] sm:$0xf]
  %v644 = vld [vmem:[%s95 + $0xc] sm:$0xf]
  %v649 = vunpack.c.l.b16 %v641
  %v650 = vunpack.c.l.b16 %v642
  %v651 = vunpack.c.l.b16 %v643
  %v652 = vunpack.c.l.b16 %v644
  %v653 = vpack.c.b16 %v650, %v649
  %v654 = vpack.c.b16 %v652, %v651
  %657 = vmatprep.subr.bf16.mxu0 0
  %658 = vmatpush1.bf16.msra.mxu0 %v653
  %659 = vmatprep.subr.bf16.mxu0 0
  %660 = vmatpush1.bf16.msra.mxu0 %v654
  %661 = vmatprep.subr.bf16.mxu0 0
  %662 = vmatpush1.bf16.msra.mxu0 0
  %663 = vmatprep.subr.bf16.mxu0 0
  %664 = vmatpush1.bf16.msra.mxu0 0
  %665 = vmatprep.subr.bf16.mxu0 0
  %666 = vmatpush1.bf16.msra.mxu0 0
  %667 = vmatprep.subr.bf16.mxu0 0
  %668 = vmatpush1.bf16.msra.mxu0 0
  %669 = vmatprep.subr.bf16.mxu0 0
  %670 = vmatpush1.bf16.msra.mxu0 0
  %671 = vmatprep.subr.bf16.mxu0 0
  %672 = vmatpush1.bf16.msra.mxu0 0
  %673 = vmatprep.subr.bf16.mxu0 0
  %674 = vmatpush1.bf16.msra.mxu0 0
  %675 = vmatprep.subr.bf16.mxu0 0
  %676 = vmatpush1.bf16.msra.mxu0 0
  %677 = vmatprep.subr.bf16.mxu0 0
  %678 = vmatpush1.bf16.msra.mxu0 0
  %679 = vmatprep.subr.bf16.mxu0 0
  %680 = vmatpush1.bf16.msra.mxu0 0
  %681 = vmatprep.subr.bf16.mxu0 0
  %682 = vmatpush1.bf16.msra.mxu0 0
  %683 = vmatprep.subr.bf16.mxu0 0
  %684 = vmatpush1.bf16.msra.mxu0 0
  %685 = vmatprep.subr.bf16.mxu0 0
  %686 = vmatpush1.bf16.msra.mxu0 0
  %687 = vmatprep.subr.bf16.mxu0 0
  %688 = vmatpush1.bf16.msra.mxu0 0
  %689 = vmatprep.mubr.bf16.mxu0 0
  %690 = vmatmul.mubr.bf16.gmra.mrb[0].mxu0 %v541
  %v691 = vpop.f32.mrb[0].mxu0
  %v692 = vadd.f32 0.0, %v691
  %v693 = vpop.f32.mrb[0].mxu0
  %v694 = vpop.f32.mrb[0].mxu0
  %v695 = vpop.f32.mrb[0].mxu0
  %696 = vdwg.mxu0
  %v697 = vld [vmem:[%s152] sm:$0xf]
  %v698 = vld [vmem:[%s152 + $0x4] sm:$0xf]
  %v699 = vld [vmem:[%s152 + $0x8] sm:$0xf]
  %v700 = vld [vmem:[%s152 + $0xc] sm:$0xf]
  %v701 = vld [vmem:[%s3] sm:$0x1]
  %v703 = vlaneseq
  %v704 = vshrl.u32 %v703, 7
  %v705 = vsub.s32 0, %v704
  %v706 = vrot.slane %v701, %v705
  %v712 = vunpack.c.l.b16 %v697
  %v713 = vunpack.c.l.b16 %v698
  %v714 = vunpack.c.l.b16 %v699
  %v715 = vunpack.c.l.b16 %v700
  %v716 = vpack.c.b16 %v713, %v712
  %v717 = vpack.c.b16 %v715, %v714
  %720 = vmatprep.subr.bf16.mxu0 0
  %721 = vmatpush1.bf16.msra.mxu0 %v716
  %722 = vmatprep.subr.bf16.mxu0 0
  %723 = vmatpush1.bf16.msra.mxu0 %v717
  %724 = vmatprep.subr.bf16.mxu0 0
  %725 = vmatpush1.bf16.msra.mxu0 0
  %726 = vmatprep.subr.bf16.mxu0 0
  %727 = vmatpush1.bf16.msra.mxu0 0
  %728 = vmatprep.subr.bf16.mxu0 0
  %729 = vmatpush1.bf16.msra.mxu0 0
  %730 = vmatprep.subr.bf16.mxu0 0
  %731 = vmatpush1.bf16.msra.mxu0 0
  %732 = vmatprep.subr.bf16.mxu0 0
  %733 = vmatpush1.bf16.msra.mxu0 0
  %734 = vmatprep.subr.bf16.mxu0 0
  %735 = vmatpush1.bf16.msra.mxu0 0
  %736 = vmatprep.subr.bf16.mxu0 0
  %737 = vmatpush1.bf16.msra.mxu0 0
  %738 = vmatprep.subr.bf16.mxu0 0
  %739 = vmatpush1.bf16.msra.mxu0 0
  %740 = vmatprep.subr.bf16.mxu0 0
  %741 = vmatpush1.bf16.msra.mxu0 0
  %742 = vmatprep.subr.bf16.mxu0 0
  %743 = vmatpush1.bf16.msra.mxu0 0
  %744 = vmatprep.subr.bf16.mxu0 0
  %745 = vmatpush1.bf16.msra.mxu0 0
  %746 = vmatprep.subr.bf16.mxu0 0
  %747 = vmatpush1.bf16.msra.mxu0 0
  %748 = vmatprep.subr.bf16.mxu0 0
  %749 = vmatpush1.bf16.msra.mxu0 0
  %750 = vmatprep.subr.bf16.mxu0 0
  %751 = vmatpush1.bf16.msra.mxu0 0
  %752 = vmatprep.mubr.bf16.mxu0 0
  %753 = vmatmul.mubr.bf16.gmra.mrb[0].mxu0 %v541
  %v754 = vpop.f32.mrb[0].mxu0
  %v755 = vadd.f32 %v706, %v754
  %v756 = vpop.f32.mrb[0].mxu0
  %v757 = vpop.f32.mrb[0].mxu0
  %v758 = vpop.f32.mrb[0].mxu0
  %759 = vdwg.mxu0
  %s760 = scalar_lea.vmem %s0, 16
  %v761 = vld [vmem:[%s760] sm:$0xff]
  %v762 = vadd.f32 %v761, %v636
  %v763 = vxor.u32 %v762, 2147483648
  %v764 = vmul.f32 %v763, 1.442695
  %v765 = vpow.pop %v764
  %v766 = vadd.f32 %v765, 1.0
  %v767 = vrcp.pop %v766
  %v768 = vmul.f32 1.0, %v767
  %s769 = scalar_lea.vmem %s0, 56
  %v770 = vld [vmem:[%s769] sm:$0xff]
  %v771 = vadd.f32 %v770, %v692
  %v772 = vxor.u32 %v771, 2147483648
  %v773 = vmul.f32 %v772, 1.442695
  %v774 = vpow.pop %v773
  %v775 = vadd.f32 %v774, 1.0
  %v776 = vrcp.pop %v775
  %v777 = vmul.f32 1.0, %v776
  %s778 = scalar_lea.vmem %s0, 96
  %v779 = vld [vmem:[%s778] sm:$0xff]
  %v780 = vmul.f32 %v768, %v755
  %v781 = vadd.f32 %v779, %v780
  %v782 = vtanh.pop %v781
  %v783 = vsub.f32 1.0, %v777
  %v784 = vmul.f32 %v783, %v782
  %v785 = vmul.f32 %v777, %v513
  %v786 = vadd.f32 %v784, %v785
  %s787 = scalar_lea.vmem %s6, 16
  %788 = vst.msk [vmem:[%s787] sm:$0xff] %vm51, %v786
  %v789 = vpack.c.bf16 %v786, %v786
  %v790 = vld [vmem:[%s4] sm:$0xf]
  %v791 = vld [vmem:[%s4 + $0x4] sm:$0xf]
  %v792 = vld [vmem:[%s4 + $0x8] sm:$0xf]
  %v793 = vld [vmem:[%s4 + $0xc] sm:$0xf]
  %v794 = vld [vmem:[%s5] sm:$0x1]
  %v796 = vlaneseq
  %v797 = vshrl.u32 %v796, 7
  %v798 = vsub.s32 0, %v797
  %v799 = vrot.slane %v794, %v798
  %v805 = vunpack.c.l.b16 %v790
  %v806 = vunpack.c.l.b16 %v791
  %v807 = vunpack.c.l.b16 %v792
  %v808 = vunpack.c.l.b16 %v793
  %v809 = vpack.c.b16 %v806, %v805
  %v810 = vpack.c.b16 %v808, %v807
  %v814 = vsel %vm51, %v789, 0
  %816 = vmatprep.subr.bf16.mxu0 0
  %817 = vmatpush1.bf16.msra.mxu0 %v809
  %818 = vmatprep.subr.bf16.mxu0 0
  %819 = vmatpush1.bf16.msra.mxu0 %v810
  %820 = vmatprep.subr.bf16.mxu0 0
  %821 = vmatpush1.bf16.msra.mxu0 0
  %822 = vmatprep.subr.bf16.mxu0 0
  %823 = vmatpush1.bf16.msra.mxu0 0
  %824 = vmatprep.subr.bf16.mxu0 0
  %825 = vmatpush1.bf16.msra.mxu0 0
  %826 = vmatprep.subr.bf16.mxu0 0
  %827 = vmatpush1.bf16.msra.mxu0 0
  %828 = vmatprep.subr.bf16.mxu0 0
  %829 = vmatpush1.bf16.msra.mxu0 0
  %830 = vmatprep.subr.bf16.mxu0 0
  %831 = vmatpush1.bf16.msra.mxu0 0
  %832 = vmatprep.subr.bf16.mxu0 0
  %833 = vmatpush1.bf16.msra.mxu0 0
  %834 = vmatprep.subr.bf16.mxu0 0
  %835 = vmatpush1.bf16.msra.mxu0 0
  %836 = vmatprep.subr.bf16.mxu0 0
  %837 = vmatpush1.bf16.msra.mxu0 0
  %838 = vmatprep.subr.bf16.mxu0 0
  %839 = vmatpush1.bf16.msra.mxu0 0
  %840 = vmatprep.subr.bf16.mxu0 0
  %841 = vmatpush1.bf16.msra.mxu0 0
  %842 = vmatprep.subr.bf16.mxu0 0
  %843 = vmatpush1.bf16.msra.mxu0 0
  %844 = vmatprep.subr.bf16.mxu0 0
  %845 = vmatpush1.bf16.msra.mxu0 0
  %846 = vmatprep.subr.bf16.mxu0 0
  %847 = vmatpush1.bf16.msra.mxu0 0
  %848 = vmatprep.mubr.bf16.mxu0 0
  %849 = vmatmul.mubr.bf16.gmra.mrb[0].mxu0 %v814
  %v850 = vpop.f32.mrb[0].mxu0
  %v851 = vadd.f32 %v799, %v850
  %v852 = vpop.f32.mrb[0].mxu0
  %v853 = vpop.f32.mrb[0].mxu0
  %v854 = vpop.f32.mrb[0].mxu0
  %855 = vdwg.mxu0
  %s856 = scalar_lea.vmem %s7, 16
  %857 = vst.msk [vmem:[%s856] sm:$0xff] %vm310, %v851
  %v858 = vld [vmem:[%s2] sm:$0xf]
  %v859 = vld [vmem:[%s2 + $0x4] sm:$0xf]
  %v860 = vld [vmem:[%s2 + $0x8] sm:$0xf]
  %v861 = vld [vmem:[%s2 + $0xc] sm:$0xf]
  %v866 = vunpack.c.l.b16 %v858
  %v867 = vunpack.c.l.b16 %v859
  %v868 = vunpack.c.l.b16 %v860
  %v869 = vunpack.c.l.b16 %v861
  %v870 = vpack.c.b16 %v867, %v866
  %v871 = vpack.c.b16 %v869, %v868
  %874 = vmatprep.subr.bf16.mxu0 0
  %875 = vmatpush1.bf16.msra.mxu0 %v870
  %876 = vmatprep.subr.bf16.mxu0 0
  %877 = vmatpush1.bf16.msra.mxu0 %v871
  %878 = vmatprep.subr.bf16.mxu0 0
  %879 = vmatpush1.bf16.msra.mxu0 0
  %880 = vmatprep.subr.bf16.mxu0 0
  %881 = vmatpush1.bf16.msra.mxu0 0
  %882 = vmatprep.subr.bf16.mxu0 0
  %883 = vmatpush1.bf16.msra.mxu0 0
  %884 = vmatprep.subr.bf16.mxu0 0
  %885 = vmatpush1.bf16.msra.mxu0 0
  %886 = vmatprep.subr.bf16.mxu0 0
  %887 = vmatpush1.bf16.msra.mxu0 0
  %888 = vmatprep.subr.bf16.mxu0 0
  %889 = vmatpush1.bf16.msra.mxu0 0
  %890 = vmatprep.subr.bf16.mxu0 0
  %891 = vmatpush1.bf16.msra.mxu0 0
  %892 = vmatprep.subr.bf16.mxu0 0
  %893 = vmatpush1.bf16.msra.mxu0 0
  %894 = vmatprep.subr.bf16.mxu0 0
  %895 = vmatpush1.bf16.msra.mxu0 0
  %896 = vmatprep.subr.bf16.mxu0 0
  %897 = vmatpush1.bf16.msra.mxu0 0
  %898 = vmatprep.subr.bf16.mxu0 0
  %899 = vmatpush1.bf16.msra.mxu0 0
  %900 = vmatprep.subr.bf16.mxu0 0
  %901 = vmatpush1.bf16.msra.mxu0 0
  %902 = vmatprep.subr.bf16.mxu0 0
  %903 = vmatpush1.bf16.msra.mxu0 0
  %904 = vmatprep.subr.bf16.mxu0 0
  %905 = vmatpush1.bf16.msra.mxu0 0
  %906 = vmatprep.mubr.bf16.mxu0 0
  %907 = vmatmul.mubr.bf16.gmra.mrb[0].mxu0 %v814
  %v908 = vpop.f32.mrb[0].mxu0
  %v909 = vadd.f32 0.0, %v908
  %v910 = vpop.f32.mrb[0].mxu0
  %v911 = vpop.f32.mrb[0].mxu0
  %v912 = vpop.f32.mrb[0].mxu0
  %913 = vdwg.mxu0
  %v914 = vld [vmem:[%s95] sm:$0xf]
  %v915 = vld [vmem:[%s95 + $0x4] sm:$0xf]
  %v916 = vld [vmem:[%s95 + $0x8] sm:$0xf]
  %v917 = vld [vmem:[%s95 + $0xc] sm:$0xf]
  %v922 = vunpack.c.l.b16 %v914
  %v923 = vunpack.c.l.b16 %v915
  %v924 = vunpack.c.l.b16 %v916
  %v925 = vunpack.c.l.b16 %v917
  %v926 = vpack.c.b16 %v923, %v922
  %v927 = vpack.c.b16 %v925, %v924
  %930 = vmatprep.subr.bf16.mxu0 0
  %931 = vmatpush1.bf16.msra.mxu0 %v926
  %932 = vmatprep.subr.bf16.mxu0 0
  %933 = vmatpush1.bf16.msra.mxu0 %v927
  %934 = vmatprep.subr.bf16.mxu0 0
  %935 = vmatpush1.bf16.msra.mxu0 0
  %936 = vmatprep.subr.bf16.mxu0 0
  %937 = vmatpush1.bf16.msra.mxu0 0
  %938 = vmatprep.subr.bf16.mxu0 0
  %939 = vmatpush1.bf16.msra.mxu0 0
  %940 = vmatprep.subr.bf16.mxu0 0
  %941 = vmatpush1.bf16.msra.mxu0 0
  %942 = vmatprep.subr.bf16.mxu0 0
  %943 = vmatpush1.bf16.msra.mxu0 0
  %944 = vmatprep.subr.bf16.mxu0 0
  %945 = vmatpush1.bf16.msra.mxu0 0
  %946 = vmatprep.subr.bf16.mxu0 0
  %947 = vmatpush1.bf16.msra.mxu0 0
  %948 = vmatprep.subr.bf16.mxu0 0
  %949 = vmatpush1.bf16.msra.mxu0 0
  %950 = vmatprep.subr.bf16.mxu0 0
  %951 = vmatpush1.bf16.msra.mxu0 0
  %952 = vmatprep.subr.bf16.mxu0 0
  %953 = vmatpush1.bf16.msra.mxu0 0
  %954 = vmatprep.subr.bf16.mxu0 0
  %955 = vmatpush1.bf16.msra.mxu0 0
  %956 = vmatprep.subr.bf16.mxu0 0
  %957 = vmatpush1.bf16.msra.mxu0 0
  %958 = vmatprep.subr.bf16.mxu0 0
  %959 = vmatpush1.bf16.msra.mxu0 0
  %960 = vmatprep.subr.bf16.mxu0 0
  %961 = vmatpush1.bf16.msra.mxu0 0
  %962 = vmatprep.mubr.bf16.mxu0 0
  %963 = vmatmul.mubr.bf16.gmra.mrb[0].mxu0 %v814
  %v964 = vpop.f32.mrb[0].mxu0
  %v965 = vadd.f32 0.0, %v964
  %v966 = vpop.f32.mrb[0].mxu0
  %v967 = vpop.f32.mrb[0].mxu0
  %v968 = vpop.f32.mrb[0].mxu0
  %969 = vdwg.mxu0
  %v970 = vld [vmem:[%s152] sm:$0xf]
  %v971 = vld [vmem:[%s152 + $0x4] sm:$0xf]
  %v972 = vld [vmem:[%s152 + $0x8] sm:$0xf]
  %v973 = vld [vmem:[%s152 + $0xc] sm:$0xf]
  %v974 = vld [vmem:[%s3] sm:$0x1]
  %v976 = vlaneseq
  %v977 = vshrl.u32 %v976, 7
  %v978 = vsub.s32 0, %v977
  %v979 = vrot.slane %v974, %v978
  %v985 = vunpack.c.l.b16 %v970
  %v986 = vunpack.c.l.b16 %v971
  %v987 = vunpack.c.l.b16 %v972
  %v988 = vunpack.c.l.b16 %v973
  %v989 = vpack.c.b16 %v986, %v985
  %v990 = vpack.c.b16 %v988, %v987
  %993 = vmatprep.subr.bf16.mxu0 0
  %994 = vmatpush1.bf16.msra.mxu0 %v989
  %995 = vmatprep.subr.bf16.mxu0 0
  %996 = vmatpush1.bf16.msra.mxu0 %v990
  %997 = vmatprep.subr.bf16.mxu0 0
  %998 = vmatpush1.bf16.msra.mxu0 0
  %999 = vmatprep.subr.bf16.mxu0 0
  %1000 = vmatpush1.bf16.msra.mxu0 0
  %1001 = vmatprep.subr.bf16.mxu0 0
  %1002 = vmatpush1.bf16.msra.mxu0 0
  %1003 = vmatprep.subr.bf16.mxu0 0
  %1004 = vmatpush1.bf16.msra.mxu0 0
  %1005 = vmatprep.subr.bf16.mxu0 0
  %1006 = vmatpush1.bf16.msra.mxu0 0
  %1007 = vmatprep.subr.bf16.mxu0 0
  %1008 = vmatpush1.bf16.msra.mxu0 0
  %1009 = vmatprep.subr.bf16.mxu0 0
  %1010 = vmatpush1.bf16.msra.mxu0 0
  %1011 = vmatprep.subr.bf16.mxu0 0
  %1012 = vmatpush1.bf16.msra.mxu0 0
  %1013 = vmatprep.subr.bf16.mxu0 0
  %1014 = vmatpush1.bf16.msra.mxu0 0
  %1015 = vmatprep.subr.bf16.mxu0 0
  %1016 = vmatpush1.bf16.msra.mxu0 0
  %1017 = vmatprep.subr.bf16.mxu0 0
  %1018 = vmatpush1.bf16.msra.mxu0 0
  %1019 = vmatprep.subr.bf16.mxu0 0
  %1020 = vmatpush1.bf16.msra.mxu0 0
  %1021 = vmatprep.subr.bf16.mxu0 0
  %1022 = vmatpush1.bf16.msra.mxu0 0
  %1023 = vmatprep.subr.bf16.mxu0 0
  %1024 = vmatpush1.bf16.msra.mxu0 0
  %1025 = vmatprep.mubr.bf16.mxu0 0
  %1026 = vmatmul.mubr.bf16.gmra.mrb[0].mxu0 %v814
  %v1027 = vpop.f32.mrb[0].mxu0
  %v1028 = vadd.f32 %v979, %v1027
  %v1029 = vpop.f32.mrb[0].mxu0
  %v1030 = vpop.f32.mrb[0].mxu0
  %v1031 = vpop.f32.mrb[0].mxu0
  %1032 = vdwg.mxu0
  %s1033 = scalar_lea.vmem %s0, 24
  %v1034 = vld [vmem:[%s1033] sm:$0xff]
  %v1035 = vadd.f32 %v1034, %v909
  %v1036 = vxor.u32 %v1035, 2147483648
  %v1037 = vmul.f32 %v1036, 1.442695
  %v1038 = vpow.pop %v1037
  %v1039 = vadd.f32 %v1038, 1.0
  %v1040 = vrcp.pop %v1039
  %v1041 = vmul.f32 1.0, %v1040
  %s1042 = scalar_lea.vmem %s0, 64
  %v1043 = vld [vmem:[%s1042] sm:$0xff]
  %v1044 = vadd.f32 %v1043, %v965
  %v1045 = vxor.u32 %v1044, 2147483648
  %v1046 = vmul.f32 %v1045, 1.442695
  %v1047 = vpow.pop %v1046
  %v1048 = vadd.f32 %v1047, 1.0
  %v1049 = vrcp.pop %v1048
  %v1050 = vmul.f32 1.0, %v1049
  %s1051 = scalar_lea.vmem %s0, 104
  %v1052 = vld [vmem:[%s1051] sm:$0xff]
  %v1053 = vmul.f32 %v1041, %v1028
  %v1054 = vadd.f32 %v1052, %v1053
  %v1055 = vtanh.pop %v1054
  %v1056 = vsub.f32 1.0, %v1050
  %v1057 = vmul.f32 %v1056, %v1055
  %v1058 = vmul.f32 %v1050, %v786
  %v1059 = vadd.f32 %v1057, %v1058
  %s1060 = scalar_lea.vmem %s6, 24
  %1061 = vst.msk [vmem:[%s1060] sm:$0xff] %vm51, %v1059
  %v1062 = vpack.c.bf16 %v1059, %v1059
  %v1063 = vld [vmem:[%s4] sm:$0xf]
  %v1064 = vld [vmem:[%s4 + $0x4] sm:$0xf]
  %v1065 = vld [vmem:[%s4 + $0x8] sm:$0xf]
  %v1066 = vld [vmem:[%s4 + $0xc] sm:$0xf]
  %v1067 = vld [vmem:[%s5] sm:$0x1]
  %v1069 = vlaneseq
  %v1070 = vshrl.u32 %v1069, 7
  %v1071 = vsub.s32 0, %v1070
  %v1072 = vrot.slane %v1067, %v1071
  %v1078 = vunpack.c.l.b16 %v1063
  %v1079 = vunpack.c.l.b16 %v1064
  %v1080 = vunpack.c.l.b16 %v1065
  %v1081 = vunpack.c.l.b16 %v1066
  %v1082 = vpack.c.b16 %v1079, %v1078
  %v1083 = vpack.c.b16 %v1081, %v1080
  %v1087 = vsel %vm51, %v1062, 0
  %1089 = vmatprep.subr.bf16.mxu0 0
  %1090 = vmatpush1.bf16.msra.mxu0 %v1082
  %1091 = vmatprep.subr.bf16.mxu0 0
  %1092 = vmatpush1.bf16.msra.mxu0 %v1083
  %1093 = vmatprep.subr.bf16.mxu0 0
  %1094 = vmatpush1.bf16.msra.mxu0 0
  %1095 = vmatprep.subr.bf16.mxu0 0
  %1096 = vmatpush1.bf16.msra.mxu0 0
  %1097 = vmatprep.subr.bf16.mxu0 0
  %1098 = vmatpush1.bf16.msra.mxu0 0
  %1099 = vmatprep.subr.bf16.mxu0 0
  %1100 = vmatpush1.bf16.msra.mxu0 0
  %1101 = vmatprep.subr.bf16.mxu0 0
  %1102 = vmatpush1.bf16.msra.mxu0 0
  %1103 = vmatprep.subr.bf16.mxu0 0
  %1104 = vmatpush1.bf16.msra.mxu0 0
  %1105 = vmatprep.subr.bf16.mxu0 0
  %1106 = vmatpush1.bf16.msra.mxu0 0
  %1107 = vmatprep.subr.bf16.mxu0 0
  %1108 = vmatpush1.bf16.msra.mxu0 0
  %1109 = vmatprep.subr.bf16.mxu0 0
  %1110 = vmatpush1.bf16.msra.mxu0 0
  %1111 = vmatprep.subr.bf16.mxu0 0
  %1112 = vmatpush1.bf16.msra.mxu0 0
  %1113 = vmatprep.subr.bf16.mxu0 0
  %1114 = vmatpush1.bf16.msra.mxu0 0
  %1115 = vmatprep.subr.bf16.mxu0 0
  %1116 = vmatpush1.bf16.msra.mxu0 0
  %1117 = vmatprep.subr.bf16.mxu0 0
  %1118 = vmatpush1.bf16.msra.mxu0 0
  %1119 = vmatprep.subr.bf16.mxu0 0
  %1120 = vmatpush1.bf16.msra.mxu0 0
  %1121 = vmatprep.mubr.bf16.mxu0 0
  %1122 = vmatmul.mubr.bf16.gmra.mrb[0].mxu0 %v1087
  %v1123 = vpop.f32.mrb[0].mxu0
  %v1124 = vadd.f32 %v1072, %v1123
  %v1125 = vpop.f32.mrb[0].mxu0
  %v1126 = vpop.f32.mrb[0].mxu0
  %v1127 = vpop.f32.mrb[0].mxu0
  %1128 = vdwg.mxu0
  %s1129 = scalar_lea.vmem %s7, 24
  %1130 = vst.msk [vmem:[%s1129] sm:$0xff] %vm310, %v1124
  %v1131 = vld [vmem:[%s2] sm:$0xf]
  %v1132 = vld [vmem:[%s2 + $0x4] sm:$0xf]
  %v1133 = vld [vmem:[%s2 + $0x8] sm:$0xf]
  %v1134 = vld [vmem:[%s2 + $0xc] sm:$0xf]
  %v1139 = vunpack.c.l.b16 %v1131
  %v1140 = vunpack.c.l.b16 %v1132
  %v1141 = vunpack.c.l.b16 %v1133
  %v1142 = vunpack.c.l.b16 %v1134
  %v1143 = vpack.c.b16 %v1140, %v1139
  %v1144 = vpack.c.b16 %v1142, %v1141
  %1147 = vmatprep.subr.bf16.mxu0 0
  %1148 = vmatpush1.bf16.msra.mxu0 %v1143
  %1149 = vmatprep.subr.bf16.mxu0 0
  %1150 = vmatpush1.bf16.msra.mxu0 %v1144
  %1151 = vmatprep.subr.bf16.mxu0 0
  %1152 = vmatpush1.bf16.msra.mxu0 0
  %1153 = vmatprep.subr.bf16.mxu0 0
  %1154 = vmatpush1.bf16.msra.mxu0 0
  %1155 = vmatprep.subr.bf16.mxu0 0
  %1156 = vmatpush1.bf16.msra.mxu0 0
  %1157 = vmatprep.subr.bf16.mxu0 0
  %1158 = vmatpush1.bf16.msra.mxu0 0
  %1159 = vmatprep.subr.bf16.mxu0 0
  %1160 = vmatpush1.bf16.msra.mxu0 0
  %1161 = vmatprep.subr.bf16.mxu0 0
  %1162 = vmatpush1.bf16.msra.mxu0 0
  %1163 = vmatprep.subr.bf16.mxu0 0
  %1164 = vmatpush1.bf16.msra.mxu0 0
  %1165 = vmatprep.subr.bf16.mxu0 0
  %1166 = vmatpush1.bf16.msra.mxu0 0
  %1167 = vmatprep.subr.bf16.mxu0 0
  %1168 = vmatpush1.bf16.msra.mxu0 0
  %1169 = vmatprep.subr.bf16.mxu0 0
  %1170 = vmatpush1.bf16.msra.mxu0 0
  %1171 = vmatprep.subr.bf16.mxu0 0
  %1172 = vmatpush1.bf16.msra.mxu0 0
  %1173 = vmatprep.subr.bf16.mxu0 0
  %1174 = vmatpush1.bf16.msra.mxu0 0
  %1175 = vmatprep.subr.bf16.mxu0 0
  %1176 = vmatpush1.bf16.msra.mxu0 0
  %1177 = vmatprep.subr.bf16.mxu0 0
  %1178 = vmatpush1.bf16.msra.mxu0 0
  %1179 = vmatprep.mubr.bf16.mxu0 0
  %1180 = vmatmul.mubr.bf16.gmra.mrb[0].mxu0 %v1087
  %v1181 = vpop.f32.mrb[0].mxu0
  %v1182 = vadd.f32 0.0, %v1181
  %v1183 = vpop.f32.mrb[0].mxu0
  %v1184 = vpop.f32.mrb[0].mxu0
  %v1185 = vpop.f32.mrb[0].mxu0
  %1186 = vdwg.mxu0
  %v1187 = vld [vmem:[%s95] sm:$0xf]
  %v1188 = vld [vmem:[%s95 + $0x4] sm:$0xf]
  %v1189 = vld [vmem:[%s95 + $0x8] sm:$0xf]
  %v1190 = vld [vmem:[%s95 + $0xc] sm:$0xf]
  %v1195 = vunpack.c.l.b16 %v1187
  %v1196 = vunpack.c.l.b16 %v1188
  %v1197 = vunpack.c.l.b16 %v1189
  %v1198 = vunpack.c.l.b16 %v1190
  %v1199 = vpack.c.b16 %v1196, %v1195
  %v1200 = vpack.c.b16 %v1198, %v1197
  %1203 = vmatprep.subr.bf16.mxu0 0
  %1204 = vmatpush1.bf16.msra.mxu0 %v1199
  %1205 = vmatprep.subr.bf16.mxu0 0
  %1206 = vmatpush1.bf16.msra.mxu0 %v1200
  %1207 = vmatprep.subr.bf16.mxu0 0
  %1208 = vmatpush1.bf16.msra.mxu0 0
  %1209 = vmatprep.subr.bf16.mxu0 0
  %1210 = vmatpush1.bf16.msra.mxu0 0
  %1211 = vmatprep.subr.bf16.mxu0 0
  %1212 = vmatpush1.bf16.msra.mxu0 0
  %1213 = vmatprep.subr.bf16.mxu0 0
  %1214 = vmatpush1.bf16.msra.mxu0 0
  %1215 = vmatprep.subr.bf16.mxu0 0
  %1216 = vmatpush1.bf16.msra.mxu0 0
  %1217 = vmatprep.subr.bf16.mxu0 0
  %1218 = vmatpush1.bf16.msra.mxu0 0
  %1219 = vmatprep.subr.bf16.mxu0 0
  %1220 = vmatpush1.bf16.msra.mxu0 0
  %1221 = vmatprep.subr.bf16.mxu0 0
  %1222 = vmatpush1.bf16.msra.mxu0 0
  %1223 = vmatprep.subr.bf16.mxu0 0
  %1224 = vmatpush1.bf16.msra.mxu0 0
  %1225 = vmatprep.subr.bf16.mxu0 0
  %1226 = vmatpush1.bf16.msra.mxu0 0
  %1227 = vmatprep.subr.bf16.mxu0 0
  %1228 = vmatpush1.bf16.msra.mxu0 0
  %1229 = vmatprep.subr.bf16.mxu0 0
  %1230 = vmatpush1.bf16.msra.mxu0 0
  %1231 = vmatprep.subr.bf16.mxu0 0
  %1232 = vmatpush1.bf16.msra.mxu0 0
  %1233 = vmatprep.subr.bf16.mxu0 0
  %1234 = vmatpush1.bf16.msra.mxu0 0
  %1235 = vmatprep.mubr.bf16.mxu0 0
  %1236 = vmatmul.mubr.bf16.gmra.mrb[0].mxu0 %v1087
  %v1237 = vpop.f32.mrb[0].mxu0
  %v1238 = vadd.f32 0.0, %v1237
  %v1239 = vpop.f32.mrb[0].mxu0
  %v1240 = vpop.f32.mrb[0].mxu0
  %v1241 = vpop.f32.mrb[0].mxu0
  %1242 = vdwg.mxu0
  %v1243 = vld [vmem:[%s152] sm:$0xf]
  %v1244 = vld [vmem:[%s152 + $0x4] sm:$0xf]
  %v1245 = vld [vmem:[%s152 + $0x8] sm:$0xf]
  %v1246 = vld [vmem:[%s152 + $0xc] sm:$0xf]
  %v1247 = vld [vmem:[%s3] sm:$0x1]
  %v1249 = vlaneseq
  %v1250 = vshrl.u32 %v1249, 7
  %v1251 = vsub.s32 0, %v1250
  %v1252 = vrot.slane %v1247, %v1251
  %v1258 = vunpack.c.l.b16 %v1243
  %v1259 = vunpack.c.l.b16 %v1244
  %v1260 = vunpack.c.l.b16 %v1245
  %v1261 = vunpack.c.l.b16 %v1246
  %v1262 = vpack.c.b16 %v1259, %v1258
  %v1263 = vpack.c.b16 %v1261, %v1260
  %1266 = vmatprep.subr.bf16.mxu0 0
  %1267 = vmatpush1.bf16.msra.mxu0 %v1262
  %1268 = vmatprep.subr.bf16.mxu0 0
  %1269 = vmatpush1.bf16.msra.mxu0 %v1263
  %1270 = vmatprep.subr.bf16.mxu0 0
  %1271 = vmatpush1.bf16.msra.mxu0 0
  %1272 = vmatprep.subr.bf16.mxu0 0
  %1273 = vmatpush1.bf16.msra.mxu0 0
  %1274 = vmatprep.subr.bf16.mxu0 0
  %1275 = vmatpush1.bf16.msra.mxu0 0
  %1276 = vmatprep.subr.bf16.mxu0 0
  %1277 = vmatpush1.bf16.msra.mxu0 0
  %1278 = vmatprep.subr.bf16.mxu0 0
  %1279 = vmatpush1.bf16.msra.mxu0 0
  %1280 = vmatprep.subr.bf16.mxu0 0
  %1281 = vmatpush1.bf16.msra.mxu0 0
  %1282 = vmatprep.subr.bf16.mxu0 0
  %1283 = vmatpush1.bf16.msra.mxu0 0
  %1284 = vmatprep.subr.bf16.mxu0 0
  %1285 = vmatpush1.bf16.msra.mxu0 0
  %1286 = vmatprep.subr.bf16.mxu0 0
  %1287 = vmatpush1.bf16.msra.mxu0 0
  %1288 = vmatprep.subr.bf16.mxu0 0
  %1289 = vmatpush1.bf16.msra.mxu0 0
  %1290 = vmatprep.subr.bf16.mxu0 0
  %1291 = vmatpush1.bf16.msra.mxu0 0
  %1292 = vmatprep.subr.bf16.mxu0 0
  %1293 = vmatpush1.bf16.msra.mxu0 0
  %1294 = vmatprep.subr.bf16.mxu0 0
  %1295 = vmatpush1.bf16.msra.mxu0 0
  %1296 = vmatprep.subr.bf16.mxu0 0
  %1297 = vmatpush1.bf16.msra.mxu0 0
  %1298 = vmatprep.mubr.bf16.mxu0 0
  %1299 = vmatmul.mubr.bf16.gmra.mrb[0].mxu0 %v1087
  %v1300 = vpop.f32.mrb[0].mxu0
  %v1301 = vadd.f32 %v1252, %v1300
  %v1302 = vpop.f32.mrb[0].mxu0
  %v1303 = vpop.f32.mrb[0].mxu0
  %v1304 = vpop.f32.mrb[0].mxu0
  %1305 = vdwg.mxu0
  %s1306 = scalar_lea.vmem %s0, 32
  %v1307 = vld [vmem:[%s1306] sm:$0xff]
  %v1308 = vadd.f32 %v1307, %v1182
  %v1309 = vxor.u32 %v1308, 2147483648
  %v1310 = vmul.f32 %v1309, 1.442695
  %v1311 = vpow.pop %v1310
  %v1312 = vadd.f32 %v1311, 1.0
  %v1313 = vrcp.pop %v1312
  %v1314 = vmul.f32 1.0, %v1313
  %s1315 = scalar_lea.vmem %s0, 72
  %v1316 = vld [vmem:[%s1315] sm:$0xff]
  %v1317 = vadd.f32 %v1316, %v1238
  %v1318 = vxor.u32 %v1317, 2147483648
  %v1319 = vmul.f32 %v1318, 1.442695
  %v1320 = vpow.pop %v1319
  %v1321 = vadd.f32 %v1320, 1.0
  %v1322 = vrcp.pop %v1321
  %v1323 = vmul.f32 1.0, %v1322
  %s1324 = scalar_lea.vmem %s0, 112
  %v1325 = vld [vmem:[%s1324] sm:$0xff]
  %v1326 = vmul.f32 %v1314, %v1301
  %v1327 = vadd.f32 %v1325, %v1326
  %v1328 = vtanh.pop %v1327
  %v1329 = vsub.f32 1.0, %v1323
  %v1330 = vmul.f32 %v1329, %v1328
  %v1331 = vmul.f32 %v1323, %v1059
  %v1332 = vadd.f32 %v1330, %v1331
  %s1333 = scalar_lea.vmem %s6, 32
  %1334 = vst.msk [vmem:[%s1333] sm:$0xff] %vm51, %v1332
  %v1335 = vpack.c.bf16 %v1332, %v1332
  %v1336 = vld [vmem:[%s4] sm:$0xf]
  %v1337 = vld [vmem:[%s4 + $0x4] sm:$0xf]
  %v1338 = vld [vmem:[%s4 + $0x8] sm:$0xf]
  %v1339 = vld [vmem:[%s4 + $0xc] sm:$0xf]
  %v1340 = vld [vmem:[%s5] sm:$0x1]
  %v1342 = vlaneseq
  %v1343 = vshrl.u32 %v1342, 7
  %v1344 = vsub.s32 0, %v1343
  %v1345 = vrot.slane %v1340, %v1344
  %v1351 = vunpack.c.l.b16 %v1336
  %v1352 = vunpack.c.l.b16 %v1337
  %v1353 = vunpack.c.l.b16 %v1338
  %v1354 = vunpack.c.l.b16 %v1339
  %v1355 = vpack.c.b16 %v1352, %v1351
  %v1356 = vpack.c.b16 %v1354, %v1353
  %v1360 = vsel %vm51, %v1335, 0
  %1362 = vmatprep.subr.bf16.mxu0 0
  %1363 = vmatpush1.bf16.msra.mxu0 %v1355
  %1364 = vmatprep.subr.bf16.mxu0 0
  %1365 = vmatpush1.bf16.msra.mxu0 %v1356
  %1366 = vmatprep.subr.bf16.mxu0 0
  %1367 = vmatpush1.bf16.msra.mxu0 0
  %1368 = vmatprep.subr.bf16.mxu0 0
  %1369 = vmatpush1.bf16.msra.mxu0 0
  %1370 = vmatprep.subr.bf16.mxu0 0
  %1371 = vmatpush1.bf16.msra.mxu0 0
  %1372 = vmatprep.subr.bf16.mxu0 0
  %1373 = vmatpush1.bf16.msra.mxu0 0
  %1374 = vmatprep.subr.bf16.mxu0 0
  %1375 = vmatpush1.bf16.msra.mxu0 0
  %1376 = vmatprep.subr.bf16.mxu0 0
  %1377 = vmatpush1.bf16.msra.mxu0 0
  %1378 = vmatprep.subr.bf16.mxu0 0
  %1379 = vmatpush1.bf16.msra.mxu0 0
  %1380 = vmatprep.subr.bf16.mxu0 0
  %1381 = vmatpush1.bf16.msra.mxu0 0
  %1382 = vmatprep.subr.bf16.mxu0 0
  %1383 = vmatpush1.bf16.msra.mxu0 0
  %1384 = vmatprep.subr.bf16.mxu0 0
  %1385 = vmatpush1.bf16.msra.mxu0 0
  %1386 = vmatprep.subr.bf16.mxu0 0
  %1387 = vmatpush1.bf16.msra.mxu0 0
  %1388 = vmatprep.subr.bf16.mxu0 0
  %1389 = vmatpush1.bf16.msra.mxu0 0
  %1390 = vmatprep.subr.bf16.mxu0 0
  %1391 = vmatpush1.bf16.msra.mxu0 0
  %1392 = vmatprep.subr.bf16.mxu0 0
  %1393 = vmatpush1.bf16.msra.mxu0 0
  %1394 = vmatprep.mubr.bf16.mxu0 0
  %1395 = vmatmul.mubr.bf16.gmra.mrb[0].mxu0 %v1360
  %v1396 = vpop.f32.mrb[0].mxu0
  %v1397 = vadd.f32 %v1345, %v1396
  %v1398 = vpop.f32.mrb[0].mxu0
  %v1399 = vpop.f32.mrb[0].mxu0
  %v1400 = vpop.f32.mrb[0].mxu0
  %1401 = vdwg.mxu0
  %s1402 = scalar_lea.vmem %s7, 32
  %1403 = vst.msk [vmem:[%s1402] sm:$0xff] %vm310, %v1397
  %1404 = vst.msk [vmem:[#allocation2] sm:$0xff] %vm51, %v1332
  // Predicated region
  $region30: #{rnn_icm_agent_forward.3} parent=0 // pred_check
    _
  $region31: #{rnn_icm_agent_forward.3} parent=0 // pred_check_branch
    %1406 = sbr.rel (0) target = $region33
  $region32: #{rnn_icm_agent_forward.3} parent=0 // pred_region
    _
  $region33: #{rnn_icm_agent_forward.3} parent=0 // pred_fallthru
    _
  // Predicated region
  $region34: #{rnn_icm_agent_forward.3} parent=0 // pred_check
    _
  $region35: #{rnn_icm_agent_forward.3} parent=0 // pred_check_branch
    %1408 = sbr.rel (0) target = $region37
  $region36: #{rnn_icm_agent_forward.3} parent=0 // pred_region
    _
  $region37: #{rnn_icm_agent_forward.3} parent=0 // pred_fallthru
    _
  // Predicated region
  $region38: #{rnn_icm_agent_forward.3} parent=0 // pred_check
    _
  $region39: #{rnn_icm_agent_forward.3} parent=0 // pred_check_branch
    %1410 = sbr.rel (0) target = $region41
  $region40: #{rnn_icm_agent_forward.3} parent=0 // pred_region
    _
  $region41: #{rnn_icm_agent_forward.3} parent=0 // pred_fallthru
    _
  // Predicated region
  $region42: #{rnn_icm_agent_forward.3} parent=0 // pred_check
    _
  $region43: #{rnn_icm_agent_forward.3} parent=0 // pred_check_branch
    %1412 = sbr.rel (0) target = $region45
  $region44: #{rnn_icm_agent_forward.3} parent=0 // pred_region
    _
  $region45: #{rnn_icm_agent_forward.3} parent=0 // pred_fallthru
    _

</llo_original>
